<compile_context>
chip_gen: v6e
topology: v6e:2x2x1
jax: 0.10.0
libtpu: 0.0.40
codegen_flags: <defaults>
</compile_context>

<pallas_src>
import functools

import jax
import jax.numpy as jnp
from jax.experimental import pallas as pl
from jax.experimental.pallas import tpu as pltpu

LANE = 128                      # TPU lane width (last-dim tile)
VMEM_LIMIT = 32 * 1024 * 1024   # >= kernel usage, <= physical VMEM on v5e/v6e/v7x


def _round_up(x, m):
    return (x + m - 1) // m * m


def _pad_to(arr, axis, size):
    pad = size - arr.shape[axis]
    if pad <= 0:
        return arr
    widths = [(0, 0)] * arr.ndim
    widths[axis] = (0, pad)
    return jnp.pad(arr, widths)


def _pick_k_tile(k, max_tk):
    """Largest multiple-of-128 divisor of k that is <= max_tk (k is a 128-mult)."""
    if k <= max_tk:
        return k
    m = k // LANE
    best = 1
    for d in range(1, m + 1):
        if m % d == 0 and d * LANE <= max_tk:
            best = d
    return best * LANE


# -----------------------------------------------------------------------------
# Pallas kernels
# -----------------------------------------------------------------------------
def conv_relu_pool_kernel(p_ref, w_ref, b_ref, o_ref, *, tall):
    """Fused 3x3-conv (im2col matmul) + bias + ReLU + 2x2 max-pool.

    p_ref: (4, TQ, K)  patches; index t = position inside the 2x2 pooling
                       window, rows ordered (batch, out_i, out_j).
    w_ref: (K, N)      conv weight as a matmul matrix (K = 9*Cin, unpadded).
    b_ref: (1, N)      f32 bias.
    o_ref: (TQ, N)     pooled output, rows ordered (batch, out_i, out_j).

    max_t relu(y_t + b) == relu(max_t(y_t) + b): pool the raw f32 accumulators.
    """
    w = w_ref[...]
    if tall:
        tq = p_ref.shape[1]
        # One tall matmul keeps the MXU pipeline full (single RHS push);
        # reshape is a pure view because tq % 8 == 0.
        y = jnp.dot(p_ref[...].reshape(4 * tq, p_ref.shape[2]), w,
                    preferred_element_type=jnp.float32)
        m = jnp.maximum(jnp.maximum(y[0 * tq:1 * tq], y[1 * tq:2 * tq]),
                        jnp.maximum(y[2 * tq:3 * tq], y[3 * tq:4 * tq]))
    else:  # rare fallback when the row tile is not sublane aligned
        m = jnp.dot(p_ref[0], w, preferred_element_type=jnp.float32)
        for t in range(1, 4):
            m = jnp.maximum(m, jnp.dot(p_ref[t], w,
                                       preferred_element_type=jnp.float32))
    o_ref[...] = jnp.maximum(m + b_ref[...], 0.0).astype(o_ref.dtype)


def mlp_head_kernel(x_ref, w1_ref, b1_ref, w2_ref, b2_ref, o_ref, acc_ref):
    """Fused fc2(fc1(x)) with fc1's contraction dim tiled over grid axis 1."""
    k = pl.program_id(1)

    @pl.when(k == 0)
    def _():
        acc_ref[...] = jnp.zeros_like(acc_ref)

    acc_ref[...] += jnp.dot(x_ref[...], w1_ref[...],
                            preferred_element_type=jnp.float32)

    @pl.when(k == pl.num_programs(1) - 1)
    def _():
        h = acc_ref[...] + b1_ref[...]                     # f32 fc1 output
        y = jnp.dot(h, w2_ref[...], preferred_element_type=jnp.float32)
        o_ref[...] = (y + b2_ref[...]).astype(o_ref.dtype)


# -----------------------------------------------------------------------------
# Layer wrappers (use_pallas=False gives an op-for-op pure-JAX mirror used as
# the correctness reference).
# -----------------------------------------------------------------------------
def _im2col_pool_blocks(a):
    """a: (B, H, W, C) -> (4, Q, 9C) patches grouped by 2x2-window position.

    Block t holds patches of conv-output pixel (2*i + t//2, 2*j + t%2); rows in
    each block are (batch, i, j)-major, Q = B*(H//2)*(W//2).  No K padding.
    """
    B, H, W, C = a.shape
    ap = jnp.pad(a, ((0, 0), (1, 1), (1, 1), (0, 0)))
    cols = [ap[:, dy:dy + H, dx:dx + W, :] for dy in range(3) for dx in range(3)]
    patches = jnp.concatenate(cols, axis=-1)            # (B, H, W, 9C), (dy,dx,c)
    q = B * (H // 2) * (W // 2)
    blocks = [patches[:, ph::2, pw::2, :].reshape(q, 9 * C)
              for ph in range(2) for pw in range(2)]
    return jnp.stack(blocks, axis=0)                    # (4, Q, 9C)


def _conv_relu_pool(a, w_mat, bias, *, use_pallas, block_q=1024):
    """a: (B, H, W, Cin) -> (B, H//2, W//2, Cout) in a.dtype."""
    B, H, W, _ = a.shape
    kdim, n_out = w_mat.shape
    q = B * (H // 2) * (W // 2)
    p4 = _im2col_pool_blocks(a)
    if use_pallas:
        tq = q if q <= block_q else block_q
        kernel = functools.partial(conv_relu_pool_kernel, tall=(tq % 8 == 0))
        # TODO(synk): weights/bias could be single-buffered (constant index_map).
        out = pl.pallas_call(
            kernel,
            out_shape=jax.ShapeDtypeStruct((q, n_out), a.dtype),
            grid=(pl.cdiv(q, tq),),
            in_specs=[
                pl.BlockSpec((4, tq, kdim), lambda i: (0, i, 0)),
                pl.BlockSpec((kdim, n_out), lambda i: (0, 0)),  # weight resident
                pl.BlockSpec((1, n_out), lambda i: (0, 0)),
            ],
            out_specs=pl.BlockSpec((tq, n_out), lambda i: (i, 0)),
            compiler_params=pltpu.CompilerParams(
                dimension_semantics=("parallel",),
                vmem_limit_bytes=VMEM_LIMIT),
        )(p4, w_mat, bias)
    else:  # pure-JAX mirror with identical cast points
        acc = jnp.dot(p4[0], w_mat, preferred_element_type=jnp.float32)
        for t in range(1, 4):
            acc = jnp.maximum(
                acc, jnp.dot(p4[t], w_mat, preferred_element_type=jnp.float32))
        out = jnp.maximum(acc + bias, 0.0).astype(a.dtype)
    return out.reshape(B, H // 2, W // 2, n_out)


def _mlp_head(feats, w1, b1, w2, b2, *, use_pallas, block_b=256, block_k=2048):
    """feats: (B, K1) bf16 -> (B, N2) f32 (N2 lane-padded; sliced by caller)."""
    B, k1 = feats.shape
    n1 = w1.shape[1]
    n2 = w2.shape[1]
    if not use_pallas:
        h = jnp.dot(feats, w1, preferred_element_type=jnp.float32) + b1
        return jnp.dot(h, w2, preferred_element_type=jnp.float32) + b2
    tb = B if B <= block_b else block_b
    tk = _pick_k_tile(k1, block_k)              # exact divisor of K1
    return pl.pallas_call(
        mlp_head_kernel,
        out_shape=jax.ShapeDtypeStruct((B, n2), jnp.float32),
        grid=(pl.cdiv(B, tb), k1 // tk),
        in_specs=[
            pl.BlockSpec((tb, tk), lambda i, k: (i, k)),
            pl.BlockSpec((tk, n1), lambda i, k: (k, 0)),   # fc1 weight streamed over K
            pl.BlockSpec((1, n1), lambda i, k: (0, 0)),
            pl.BlockSpec((n1, n2), lambda i, k: (0, 0)),   # fc2 weight resident (f32)
            pl.BlockSpec((1, n2), lambda i, k: (0, 0)),
        ],
        out_specs=pl.BlockSpec((tb, n2), lambda i, k: (i, 0)),
        scratch_shapes=[pltpu.VMEM((tb, n1), jnp.float32)],
        compiler_params=pltpu.CompilerParams(
            dimension_semantics=("parallel", "arbitrary"),
            vmem_limit_bytes=VMEM_LIMIT),
    )(feats, w1, b1, w2, b2)


def encoder_forward(x_nchw, params, *, embedding_dim,
                    compute_dtype=jnp.bfloat16, use_pallas=True):
    """Forward pass of Encoder_384. x_nchw: (B, C, H, W) float32."""
    a = jnp.transpose(x_nchw, (0, 2, 3, 1)).astype(compute_dtype)   # NHWC, C on lanes
    for w_mat, bias in params["convs"]:
        a = _conv_relu_pool(a, w_mat.astype(compute_dtype),
                            bias.astype(jnp.float32), use_pallas=use_pallas)
    # NHWC flatten (no runtime transpose); fc1 rows were permuted once at init
    # to match, so this is equivalent to torch's NCHW x.view(B, -1) + fc1.
    B, h, w, c = a.shape
    feats = a.reshape(B, h * w * c)
    w1, b1 = params["fc1"]
    w2, b2 = params["fc2"]
    out = _mlp_head(feats, w1.astype(compute_dtype), b1.astype(jnp.float32),
                    w2.astype(jnp.float32), b2.astype(jnp.float32),
                    use_pallas=use_pallas)
    return out[:, :embedding_dim]


# -----------------------------------------------------------------------------
# Parameter init (PyTorch Linear/Conv2d default: U(+-1/sqrt(fan_in))).  Conv
# weights are stored as unpadded (9*Cin, Cout) matmul matrices; fc weights keep
# only the cheap lane padding (100 -> 128, embedding_dim -> 128) with zero pad
# entries, so the math is exact.
# -----------------------------------------------------------------------------
def init_params(key, image_size, channels, embedding_dim):
    assert image_size % 8 == 0, "image_size must be divisible by 8"
    ks = jax.random.split(key, 10)

    def uniform(k, shape, fan_in):
        bound = 1.0 / jnp.sqrt(jnp.float32(fan_in))
        return jax.random.uniform(k, shape, jnp.float32, -bound, bound)

    def conv_param(kw, kb, cin, cout):
        fan_in = cin * 9
        w = uniform(kw, (3, 3, cin, cout), fan_in)     # (dy, dx, cin, cout)
        b = uniform(kb, (cout,), fan_in)
        return w.reshape(9 * cin, cout), b.reshape(1, cout)

    conv1 = conv_param(ks[0], ks[1], channels, 32)
    conv2 = conv_param(ks[2], ks[3], 32, 64)
    conv3 = conv_param(ks[4], ks[5], 64, 128)

    hf = wf = image_size // 8
    flattened = hf * wf * 128
    n1_pad = _round_up(100, LANE)
    n2_pad = _round_up(embedding_dim, LANE)

    # Sample fc1 in torch's NCHW-flatten row order, then permute rows once to
    # NHWC-flatten order so the kernel consumes the conv output directly.
    w1_nchw = uniform(ks[6], (flattened, 100), flattened)
    w1 = (w1_nchw.reshape(128, hf, wf, 100)
                 .transpose(1, 2, 0, 3)
                 .reshape(flattened, 100))
    w1 = _pad_to(w1, 1, n1_pad)
    b1 = _pad_to(uniform(ks[7], (100,), flattened), 0, n1_pad).reshape(1, n1_pad)

    w2 = _pad_to(_pad_to(uniform(ks[8], (100, embedding_dim), 100), 0, n1_pad),
                 1, n2_pad)
    b2 = _pad_to(uniform(ks[9], (embedding_dim,), 100), 0, n2_pad).reshape(1, n2_pad)

    return {"convs": [conv1, conv2, conv3], "fc1": (w1, b1), "fc2": (w2, b2)}


if __name__ == "__main__":
    key = jax.random.PRNGKey(0)
    kx, kp = jax.random.split(key)

    batch, channels, image_size, embedding_dim = 2, 4, 16, 32
    x = jax.random.normal(kx, (batch, channels, image_size, image_size),
                          jnp.float32)
    params = init_params(kp, image_size, channels, embedding_dim)

    run_pallas = jax.jit(functools.partial(
        encoder_forward, embedding_dim=embedding_dim,
        compute_dtype=jnp.bfloat16, use_pallas=True))
    out = jax.block_until_ready(run_pallas(x, params))
    assert out.shape == (batch, embedding_dim)

    # (1) Kernel correctness: pure-JAX mirror with identical bf16/f32 cast points.
    ref_mirror = encoder_forward(x, params, embedding_dim=embedding_dim,
                                 compute_dtype=jnp.bfloat16, use_pallas=False)
    assert jnp.allclose(out, ref_mirror, atol=5e-3, rtol=5e-3), (
        "Pallas output does not match same-precision JAX reference")

    # (2) Module semantics: full-f32 reference of Encoder_384.forward.
    ref_f32 = encoder_forward(x, params, embedding_dim=embedding_dim,
                              compute_dtype=jnp.float32, use_pallas=False)
    assert jnp.allclose(out, ref_f32, atol=2e-2, rtol=2e-2), (
        "Pallas output drifted from the float32 module semantics")

    print("KERNEL_OK")
</pallas_src>

<mosaic_0001>
module attributes {stable_mosaic.version = 11 : i64} {
  func.func @conv_relu_pool_kernel(%arg0: i32, %arg1: memref<4x128x36xbf16, #tpu.memory_space<vmem>>, %arg2: memref<36x32xbf16, #tpu.memory_space<vmem>>, %arg3: memref<1x32xf32, #tpu.memory_space<vmem>>, %arg4: memref<128x32xbf16, #tpu.memory_space<vmem>>) attributes {dimension_semantics = [#tpu.dimension_semantics<parallel>], iteration_bounds = array<i64: 1>, scalar_prefetch = 0 : i64, scratch_operands = 0 : i64, tpu.core_type = #tpu.core_type<tc>, window_params = [{transform_indices = @transform_0, window_bounds = array<i64: 4, 128, 36>}, {pipeline_mode = #tpu.pipeline_mode<synchronous>, transform_indices = @transform_1, window_bounds = array<i64: 36, 32>}, {pipeline_mode = #tpu.pipeline_mode<synchronous>, transform_indices = @transform_2, window_bounds = array<i64: 1, 32>}, {transform_indices = @transform_3, window_bounds = array<i64: 128, 32>}]} {
    %c0 = arith.constant 0 : index
    %c0_0 = arith.constant 0 : index
    %0 = vector.load %arg2[%c0, %c0_0] : memref<36x32xbf16, #tpu.memory_space<vmem>>, vector<36x32xbf16>
    %c0_1 = arith.constant 0 : index
    %c0_2 = arith.constant 0 : index
    %c0_3 = arith.constant 0 : index
    %1 = vector.load %arg1[%c0_1, %c0_2, %c0_3] : memref<4x128x36xbf16, #tpu.memory_space<vmem>>, vector<4x128x36xbf16>
    %2 = vector.shape_cast %1 : vector<4x128x36xbf16> to vector<512x36xbf16>
    %cst = arith.constant dense<0.000000e+00> : vector<512x32xf32>
    %3 = tpu.matmul %2, %0, %cst {dimension_numbers = #tpu.dot_dimension_numbers<[1], [0], [0], [1], [0, 0, 1, 1], [], []>} : vector<512x36xbf16>, vector<36x32xbf16>, vector<512x32xf32> -> vector<512x32xf32>
    %4 = vector.extract_strided_slice %3 {offsets = [0, 0], sizes = [128, 32], strides = [1, 1]} : vector<512x32xf32> to vector<128x32xf32>
    %5 = vector.extract_strided_slice %3 {offsets = [128, 0], sizes = [128, 32], strides = [1, 1]} : vector<512x32xf32> to vector<128x32xf32>
    %6 = arith.maximumf %4, %5 : vector<128x32xf32>
    %7 = vector.extract_strided_slice %3 {offsets = [256, 0], sizes = [128, 32], strides = [1, 1]} : vector<512x32xf32> to vector<128x32xf32>
    %8 = vector.extract_strided_slice %3 {offsets = [384, 0], sizes = [128, 32], strides = [1, 1]} : vector<512x32xf32> to vector<128x32xf32>
    %9 = arith.maximumf %7, %8 : vector<128x32xf32>
    %10 = arith.maximumf %6, %9 : vector<128x32xf32>
    %c0_4 = arith.constant 0 : index
    %c0_5 = arith.constant 0 : index
    %11 = vector.load %arg3[%c0_4, %c0_5] : memref<1x32xf32, #tpu.memory_space<vmem>>, vector<1x32xf32>
    %12 = vector.broadcast %11 : vector<1x32xf32> to vector<128x32xf32>
    %13 = arith.addf %10, %12 : vector<128x32xf32>
    %cst_6 = arith.constant 0.000000e+00 : f32
    %14 = vector.broadcast %cst_6 : f32 to vector<128x32xf32>
    %15 = arith.maximumf %13, %14 : vector<128x32xf32>
    %16 = arith.truncf %15 : vector<128x32xf32> to vector<128x32xbf16>
    %c0_7 = arith.constant 0 : index
    %c0_8 = arith.constant 0 : index
    %17 = vector.load %arg4[%c0_7, %c0_8] : memref<128x32xbf16, #tpu.memory_space<vmem>>, vector<128x32xbf16>
    tpu.vector_store %arg4[%c0_7, %c0_8], %16 {strides = array<i32>} : memref<128x32xbf16, #tpu.memory_space<vmem>>, vector<128x32xbf16>,
    return
  }
  func.func @transform_0(%arg0: i32) -> (i32, i32, i32) {
    %c0_i32 = arith.constant 0 : i32
    %c0_i32_0 = arith.constant 0 : i32
    %c0_i32_1 = arith.constant 0 : i32
    return %c0_i32, %arg0, %c0_i32_0 : i32, i32, i32
  }
  func.func @transform_1(%arg0: i32) -> (i32, i32) {
    %c0_i32 = arith.constant 0 : i32
    %c0_i32_0 = arith.constant 0 : i32
    %c0_i32_1 = arith.constant 0 : i32
    return %c0_i32, %c0_i32_0 : i32, i32
  }
  func.func @transform_2(%arg0: i32) -> (i32, i32) {
    %c0_i32 = arith.constant 0 : i32
    %c0_i32_0 = arith.constant 0 : i32
    %c0_i32_1 = arith.constant 0 : i32
    return %c0_i32, %c0_i32_0 : i32, i32
  }
  func.func @transform_3(%arg0: i32) -> (i32, i32) {
    %c0_i32 = arith.constant 0 : i32
    %c0_i32_0 = arith.constant 0 : i32
    return %arg0, %c0_i32 : i32, i32
  }
}

module attributes {stable_mosaic.version = 11 : i64} {
  func.func @conv_relu_pool_kernel(%arg0: i32, %arg1: memref<4x32x288xbf16, #tpu.memory_space<vmem>>, %arg2: memref<288x64xbf16, #tpu.memory_space<vmem>>, %arg3: memref<1x64xf32, #tpu.memory_space<vmem>>, %arg4: memref<32x64xbf16, #tpu.memory_space<vmem>>) attributes {dimension_semantics = [#tpu.dimension_semantics<parallel>], iteration_bounds = array<i64: 1>, scalar_prefetch = 0 : i64, scratch_operands = 0 : i64, tpu.core_type = #tpu.core_type<tc>, window_params = [{transform_indices = @transform_0, window_bounds = array<i64: 4, 32, 288>}, {pipeline_mode = #tpu.pipeline_mode<synchronous>, transform_indices = @transform_1, window_bounds = array<i64: 288, 64>}, {pipeline_mode = #tpu.pipeline_mode<synchronous>, transform_indices = @transform_2, window_bounds = array<i64: 1, 64>}, {transform_indices = @transform_3, window_bounds = array<i64: 32, 64>}]} {
    %c0 = arith.constant 0 : index
    %c0_0 = arith.constant 0 : index
    %0 = vector.load %arg2[%c0, %c0_0] : memref<288x64xbf16, #tpu.memory_space<vmem>>, vector<288x64xbf16>
    %c0_1 = arith.constant 0 : index
    %c0_2 = arith.constant 0 : index
    %c0_3 = arith.constant 0 : index
    %1 = vector.load %arg1[%c0_1, %c0_2, %c0_3] : memref<4x32x288xbf16, #tpu.memory_space<vmem>>, vector<4x32x288xbf16>
    %2 = vector.shape_cast %1 : vector<4x32x288xbf16> to vector<128x288xbf16>
    %cst = arith.constant dense<0.000000e+00> : vector<128x64xf32>
    %3 = tpu.matmul %2, %0, %cst {dimension_numbers = #tpu.dot_dimension_numbers<[1], [0], [0], [1], [0, 0, 1, 1], [], []>} : vector<128x288xbf16>, vector<288x64xbf16>, vector<128x64xf32> -> vector<128x64xf32>
    %4 = vector.extract_strided_slice %3 {offsets = [0, 0], sizes = [32, 64], strides = [1, 1]} : vector<128x64xf32> to vector<32x64xf32>
    %5 = vector.extract_strided_slice %3 {offsets = [32, 0], sizes = [32, 64], strides = [1, 1]} : vector<128x64xf32> to vector<32x64xf32>
    %6 = arith.maximumf %4, %5 : vector<32x64xf32>
    %7 = vector.extract_strided_slice %3 {offsets = [64, 0], sizes = [32, 64], strides = [1, 1]} : vector<128x64xf32> to vector<32x64xf32>
    %8 = vector.extract_strided_slice %3 {offsets = [96, 0], sizes = [32, 64], strides = [1, 1]} : vector<128x64xf32> to vector<32x64xf32>
    %9 = arith.maximumf %7, %8 : vector<32x64xf32>
    %10 = arith.maximumf %6, %9 : vector<32x64xf32>
    %c0_4 = arith.constant 0 : index
    %c0_5 = arith.constant 0 : index
    %11 = vector.load %arg3[%c0_4, %c0_5] : memref<1x64xf32, #tpu.memory_space<vmem>>, vector<1x64xf32>
    %12 = vector.broadcast %11 : vector<1x64xf32> to vector<32x64xf32>
    %13 = arith.addf %10, %12 : vector<32x64xf32>
    %cst_6 = arith.constant 0.000000e+00 : f32
    %14 = vector.broadcast %cst_6 : f32 to vector<32x64xf32>
    %15 = arith.maximumf %13, %14 : vector<32x64xf32>
    %16 = arith.truncf %15 : vector<32x64xf32> to vector<32x64xbf16>
    %c0_7 = arith.constant 0 : index
    %c0_8 = arith.constant 0 : index
    %17 = vector.load %arg4[%c0_7, %c0_8] : memref<32x64xbf16, #tpu.memory_space<vmem>>, vector<32x64xbf16>
    tpu.vector_store %arg4[%c0_7, %c0_8], %16 {strides = array<i32>} : memref<32x64xbf16, #tpu.memory_space<vmem>>, vector<32x64xbf16>,
    return
  }
  func.func @transform_0(%arg0: i32) -> (i32, i32, i32) {
    %c0_i32 = arith.constant 0 : i32
    %c0_i32_0 = arith.constant 0 : i32
    %c0_i32_1 = arith.constant 0 : i32
    return %c0_i32, %arg0, %c0_i32_0 : i32, i32, i32
  }
  func.func @transform_1(%arg0: i32) -> (i32, i32) {
    %c0_i32 = arith.constant 0 : i32
    %c0_i32_0 = arith.constant 0 : i32
    %c0_i32_1 = arith.constant 0 : i32
    return %c0_i32, %c0_i32_0 : i32, i32
  }
  func.func @transform_2(%arg0: i32) -> (i32, i32) {
    %c0_i32 = arith.constant 0 : i32
    %c0_i32_0 = arith.constant 0 : i32
    %c0_i32_1 = arith.constant 0 : i32
    return %c0_i32, %c0_i32_0 : i32, i32
  }
  func.func @transform_3(%arg0: i32) -> (i32, i32) {
    %c0_i32 = arith.constant 0 : i32
    %c0_i32_0 = arith.constant 0 : i32
    return %arg0, %c0_i32 : i32, i32
  }
}

module attributes {stable_mosaic.version = 11 : i64} {
  func.func @conv_relu_pool_kernel(%arg0: i32, %arg1: memref<4x8x576xbf16, #tpu.memory_space<vmem>>, %arg2: memref<576x128xbf16, #tpu.memory_space<vmem>>, %arg3: memref<1x128xf32, #tpu.memory_space<vmem>>, %arg4: memref<8x128xbf16, #tpu.memory_space<vmem>>) attributes {dimension_semantics = [#tpu.dimension_semantics<parallel>], iteration_bounds = array<i64: 1>, scalar_prefetch = 0 : i64, scratch_operands = 0 : i64, tpu.core_type = #tpu.core_type<tc>, window_params = [{transform_indices = @transform_0, window_bounds = array<i64: 4, 8, 576>}, {pipeline_mode = #tpu.pipeline_mode<synchronous>, transform_indices = @transform_1, window_bounds = array<i64: 576, 128>}, {pipeline_mode = #tpu.pipeline_mode<synchronous>, transform_indices = @transform_2, window_bounds = array<i64: 1, 128>}, {transform_indices = @transform_3, window_bounds = array<i64: 8, 128>}]} {
    %c0 = arith.constant 0 : index
    %c0_0 = arith.constant 0 : index
    %0 = vector.load %arg2[%c0, %c0_0] : memref<576x128xbf16, #tpu.memory_space<vmem>>, vector<576x128xbf16>
    %c0_1 = arith.constant 0 : index
    %c0_2 = arith.constant 0 : index
    %c0_3 = arith.constant 0 : index
    %1 = vector.load %arg1[%c0_1, %c0_2, %c0_3] : memref<4x8x576xbf16, #tpu.memory_space<vmem>>, vector<4x8x576xbf16>
    %2 = vector.shape_cast %1 : vector<4x8x576xbf16> to vector<32x576xbf16>
    %cst = arith.constant dense<0.000000e+00> : vector<32x128xf32>
    %3 = tpu.matmul %2, %0, %cst {dimension_numbers = #tpu.dot_dimension_numbers<[1], [0], [0], [1], [0, 0, 1, 1], [], []>} : vector<32x576xbf16>, vector<576x128xbf16>, vector<32x128xf32> -> vector<32x128xf32>
    %4 = vector.extract_strided_slice %3 {offsets = [0, 0], sizes = [8, 128], strides = [1, 1]} : vector<32x128xf32> to vector<8x128xf32>
    %5 = vector.extract_strided_slice %3 {offsets = [8, 0], sizes = [8, 128], strides = [1, 1]} : vector<32x128xf32> to vector<8x128xf32>
    %6 = arith.maximumf %4, %5 : vector<8x128xf32>
    %7 = vector.extract_strided_slice %3 {offsets = [16, 0], sizes = [8, 128], strides = [1, 1]} : vector<32x128xf32> to vector<8x128xf32>
    %8 = vector.extract_strided_slice %3 {offsets = [24, 0], sizes = [8, 128], strides = [1, 1]} : vector<32x128xf32> to vector<8x128xf32>
    %9 = arith.maximumf %7, %8 : vector<8x128xf32>
    %10 = arith.maximumf %6, %9 : vector<8x128xf32>
    %c0_4 = arith.constant 0 : index
    %c0_5 = arith.constant 0 : index
    %11 = vector.load %arg3[%c0_4, %c0_5] : memref<1x128xf32, #tpu.memory_space<vmem>>, vector<1x128xf32>
    %12 = vector.broadcast %11 : vector<1x128xf32> to vector<8x128xf32>
    %13 = arith.addf %10, %12 : vector<8x128xf32>
    %cst_6 = arith.constant 0.000000e+00 : f32
    %14 = vector.broadcast %cst_6 : f32 to vector<8x128xf32>
    %15 = arith.maximumf %13, %14 : vector<8x128xf32>
    %16 = arith.truncf %15 : vector<8x128xf32> to vector<8x128xbf16>
    %c0_7 = arith.constant 0 : index
    %c0_8 = arith.constant 0 : index
    %17 = vector.load %arg4[%c0_7, %c0_8] : memref<8x128xbf16, #tpu.memory_space<vmem>>, vector<8x128xbf16>
    tpu.vector_store %arg4[%c0_7, %c0_8], %16 {strides = array<i32>} : memref<8x128xbf16, #tpu.memory_space<vmem>>, vector<8x128xbf16>,
    return
  }
  func.func @transform_0(%arg0: i32) -> (i32, i32, i32) {
    %c0_i32 = arith.constant 0 : i32
    %c0_i32_0 = arith.constant 0 : i32
    %c0_i32_1 = arith.constant 0 : i32
    return %c0_i32, %arg0, %c0_i32_0 : i32, i32, i32
  }
  func.func @transform_1(%arg0: i32) -> (i32, i32) {
    %c0_i32 = arith.constant 0 : i32
    %c0_i32_0 = arith.constant 0 : i32
    %c0_i32_1 = arith.constant 0 : i32
    return %c0_i32, %c0_i32_0 : i32, i32
  }
  func.func @transform_2(%arg0: i32) -> (i32, i32) {
    %c0_i32 = arith.constant 0 : i32
    %c0_i32_0 = arith.constant 0 : i32
    %c0_i32_1 = arith.constant 0 : i32
    return %c0_i32, %c0_i32_0 : i32, i32
  }
  func.func @transform_3(%arg0: i32) -> (i32, i32) {
    %c0_i32 = arith.constant 0 : i32
    %c0_i32_0 = arith.constant 0 : i32
    return %arg0, %c0_i32 : i32, i32
  }
}

module attributes {stable_mosaic.version = 11 : i64} {
  func.func @mlp_head_kernel(%arg0: i32, %arg1: i32, %arg2: memref<2x512xbf16, #tpu.memory_space<vmem>>, %arg3: memref<512x128xbf16, #tpu.memory_space<vmem>>, %arg4: memref<1x128xf32, #tpu.memory_space<vmem>>, %arg5: memref<128x128xf32, #tpu.memory_space<vmem>>, %arg6: memref<1x128xf32, #tpu.memory_space<vmem>>, %arg7: memref<2x128xf32, #tpu.memory_space<vmem>>, %arg8: memref<2x128xf32, #tpu.memory_space<vmem>>) attributes {dimension_semantics = [#tpu.dimension_semantics<parallel>, #tpu.dimension_semantics<arbitrary>], iteration_bounds = array<i64: 1, 1>, scalar_prefetch = 0 : i64, scratch_operands = 1 : i64, tpu.core_type = #tpu.core_type<tc>, window_params = [{transform_indices = @transform_0, window_bounds = array<i64: 2, 512>}, {transform_indices = @transform_1, window_bounds = array<i64: 512, 128>}, {pipeline_mode = #tpu.pipeline_mode<synchronous>, transform_indices = @transform_2, window_bounds = array<i64: 1, 128>}, {pipeline_mode = #tpu.pipeline_mode<synchronous>, transform_indices = @transform_3, window_bounds = array<i64: 128, 128>}, {pipeline_mode = #tpu.pipeline_mode<synchronous>, transform_indices = @transform_4, window_bounds = array<i64: 1, 128>}, {transform_indices = @transform_5, window_bounds = array<i64: 2, 128>}]} {
    %c0_i32 = arith.constant 0 : i32
    %0 = arith.cmpi eq, %arg1, %c0_i32 : i32
    %1 = arith.extui %0 : i1 to i32
    %c0_i32_0 = arith.constant 0 : i32
    %2 = arith.cmpi ne, %1, %c0_i32_0 : i32
    scf.if %2 {
      %cst_10 = arith.constant 0.000000e+00 : f32
      %12 = vector.broadcast %cst_10 : f32 to vector<2x128xf32>
      %c0_11 = arith.constant 0 : index
      %c0_12 = arith.constant 0 : index
      %13 = vector.load %arg8[%c0_11, %c0_12] : memref<2x128xf32, #tpu.memory_space<vmem>>, vector<2x128xf32>
      tpu.vector_store %arg8[%c0_11, %c0_12], %12 {strides = array<i32>} : memref<2x128xf32, #tpu.memory_space<vmem>>, vector<2x128xf32>,
    } else {
    }
    %c0 = arith.constant 0 : index
    %c0_1 = arith.constant 0 : index
    %3 = vector.load %arg8[%c0, %c0_1] : memref<2x128xf32, #tpu.memory_space<vmem>>, vector<2x128xf32>
    %c0_2 = arith.constant 0 : index
    %c0_3 = arith.constant 0 : index
    %4 = vector.load %arg2[%c0_2, %c0_3] : memref<2x512xbf16, #tpu.memory_space<vmem>>, vector<2x512xbf16>
    %c0_4 = arith.constant 0 : index
    %c0_5 = arith.constant 0 : index
    %5 = vector.load %arg3[%c0_4, %c0_5] : memref<512x128xbf16, #tpu.memory_space<vmem>>, vector<512x128xbf16>
    %cst = arith.constant dense<0.000000e+00> : vector<2x128xf32>
    %6 = tpu.matmul %4, %5, %cst {dimension_numbers = #tpu.dot_dimension_numbers<[1], [0], [0], [1], [0, 0, 1, 1], [], []>} : vector<2x512xbf16>, vector<512x128xbf16>, vector<2x128xf32> -> vector<2x128xf32>
    %7 = arith.addf %3, %6 : vector<2x128xf32>
    %c0_6 = arith.constant 0 : index
    %c0_7 = arith.constant 0 : index
    %8 = vector.load %arg8[%c0_6, %c0_7] : memref<2x128xf32, #tpu.memory_space<vmem>>, vector<2x128xf32>
    tpu.vector_store %arg8[%c0_6, %c0_7], %7 {strides = array<i32>} : memref<2x128xf32, #tpu.memory_space<vmem>>, vector<2x128xf32>,
    %c0_i32_8 = arith.constant 0 : i32
    %9 = arith.cmpi eq, %arg1, %c0_i32_8 : i32
    %10 = arith.extui %9 : i1 to i32
    %c0_i32_9 = arith.constant 0 : i32
    %11 = arith.cmpi ne, %10, %c0_i32_9 : i32
    scf.if %11 {
      %c0_10 = arith.constant 0 : index
      %c0_11 = arith.constant 0 : index
      %12 = vector.load %arg8[%c0_10, %c0_11] : memref<2x128xf32, #tpu.memory_space<vmem>>, vector<2x128xf32>
      %c0_12 = arith.constant 0 : index
      %c0_13 = arith.constant 0 : index
      %13 = vector.load %arg4[%c0_12, %c0_13] : memref<1x128xf32, #tpu.memory_space<vmem>>, vector<1x128xf32>
      %14 = vector.broadcast %13 : vector<1x128xf32> to vector<2x128xf32>
      %15 = arith.addf %12, %14 : vector<2x128xf32>
      %c0_14 = arith.constant 0 : index
      %c0_15 = arith.constant 0 : index
      %16 = vector.load %arg5[%c0_14, %c0_15] : memref<128x128xf32, #tpu.memory_space<vmem>>, vector<128x128xf32>
      %cst_16 = arith.constant dense<0.000000e+00> : vector<2x128xf32>
      %17 = tpu.matmul %15, %16, %cst_16 {dimension_numbers = #tpu.dot_dimension_numbers<[1], [0], [0], [1], [0, 0, 1, 1], [], []>} : vector<2x128xf32>, vector<128x128xf32>, vector<2x128xf32> -> vector<2x128xf32>
      %c0_17 = arith.constant 0 : index
      %c0_18 = arith.constant 0 : index
      %18 = vector.load %arg6[%c0_17, %c0_18] : memref<1x128xf32, #tpu.memory_space<vmem>>, vector<1x128xf32>
      %19 = vector.broadcast %18 : vector<1x128xf32> to vector<2x128xf32>
      %20 = arith.addf %17, %19 : vector<2x128xf32>
      %c0_19 = arith.constant 0 : index
      %c0_20 = arith.constant 0 : index
      %21 = vector.load %arg7[%c0_19, %c0_20] : memref<2x128xf32, #tpu.memory_space<vmem>>, vector<2x128xf32>
      tpu.vector_store %arg7[%c0_19, %c0_20], %20 {strides = array<i32>} : memref<2x128xf32, #tpu.memory_space<vmem>>, vector<2x128xf32>,
    } else {
    }
    return
  }
  func.func @transform_0(%arg0: i32, %arg1: i32) -> (i32, i32) {
    %c0_i32 = arith.constant 0 : i32
    return %arg0, %arg1 : i32, i32
  }
  func.func @transform_1(%arg0: i32, %arg1: i32) -> (i32, i32) {
    %c0_i32 = arith.constant 0 : i32
    %c0_i32_0 = arith.constant 0 : i32
    return %arg1, %c0_i32 : i32, i32
  }
  func.func @transform_2(%arg0: i32, %arg1: i32) -> (i32, i32) {
    %c0_i32 = arith.constant 0 : i32
    %c0_i32_0 = arith.constant 0 : i32
    %c0_i32_1 = arith.constant 0 : i32
    return %c0_i32, %c0_i32_0 : i32, i32
  }
  func.func @transform_3(%arg0: i32, %arg1: i32) -> (i32, i32) {
    %c0_i32 = arith.constant 0 : i32
    %c0_i32_0 = arith.constant 0 : i32
    %c0_i32_1 = arith.constant 0 : i32
    return %c0_i32, %c0_i32_0 : i32, i32
  }
  func.func @transform_4(%arg0: i32, %arg1: i32) -> (i32, i32) {
    %c0_i32 = arith.constant 0 : i32
    %c0_i32_0 = arith.constant 0 : i32
    %c0_i32_1 = arith.constant 0 : i32
    return %c0_i32, %c0_i32_0 : i32, i32
  }
  func.func @transform_5(%arg0: i32, %arg1: i32) -> (i32, i32) {
    %c0_i32 = arith.constant 0 : i32
    %c0_i32_0 = arith.constant 0 : i32
    return %arg0, %c0_i32 : i32, i32
  }
}

</mosaic_0001>

<llo_original>
// kernel: encoder_forward.4
$region0: #{encoder_forward.4}
  #allocation0 [shape = 'u32[]', space=smem, size = 0x4, offset = 0x4, fixed_abs, tag = 'smem constant byte address 0x4 - core index']
  #allocation1 [shape = 'u32[144,128]{1,0:T(1,128)}', space=vmem, size = 0x12000, scoped, tag = 'internal scratch']
  %s0 = inlined_call_operand.vmem [shape: bf16[4,128,36], index: 0, kind: input, shape index: {}]
  %s1 = inlined_call_operand.vmem [shape: bf16[36,32], index: 1, kind: input, shape index: {}]
  %s2 = inlined_call_operand.vmem [shape: f32[1,32], index: 2, kind: input, shape index: {}]
  %s3 = inlined_call_operand.vmem [shape: bf16[128,32], index: 3, kind: output, shape index: {}]
  %s4 = sld [smem:[#allocation0]]
  $region22: #{encoder_forward.4} parent=0
    _
  %s6 = ssub.s32 1, %s4
  %s7 = scalar_select 0, %s6, %s4
  // Predicated region
  $region2: #{encoder_forward.4} parent=0 // pred_check
    _
  $region3: #{encoder_forward.4} parent=0 // pred_check_branch
    %9 = sbr.rel (0) target = $region5
  $region4: #{encoder_forward.4} parent=0 // pred_region
    _
  $region5: #{encoder_forward.4} parent=0 // pred_fallthru
    _
  // Predicated region
  $region6: #{encoder_forward.4} parent=0 // pred_check
    _
  $region7: #{encoder_forward.4} parent=0 // pred_check_branch
    %11 = sbr.rel (0) target = $region9
  $region8: #{encoder_forward.4} parent=0 // pred_region
    _
  $region9: #{encoder_forward.4} parent=0 // pred_fallthru
    _
  // Predicated region
  $region10: #{encoder_forward.4} parent=0 // pred_check
    _
  $region11: #{encoder_forward.4} parent=0 // pred_check_branch
    %13 = sbr.rel (0) target = $region13
  $region12: #{encoder_forward.4} parent=0 // pred_region
    _
  $region13: #{encoder_forward.4} parent=0 // pred_fallthru
    _
  %v15 = vld [vmem:[%s1] sm:$0xf]
  %v16 = vld [vmem:[%s1 + $0x4] sm:$0xf]
  %v17 = vld [vmem:[%s1 + $0x8] sm:$0xf]
  %v18 = vld [vmem:[%s1 + $0xc] sm:$0xf]
  %v19 = vld [vmem:[%s1 + $0x10] sm:$0x3]
  %v20 = vld [vmem:[%s0] sm:$0xf]
  %v21 = vld [vmem:[%s0 + $0x4] sm:$0xf]
  %v22 = vld [vmem:[%s0 + $0x8] sm:$0xf]
  %v23 = vld [vmem:[%s0 + $0xc] sm:$0xf]
  %v24 = vld [vmem:[%s0 + $0x10] sm:$0xf]
  %v25 = vld [vmem:[%s0 + $0x14] sm:$0xf]
  %v26 = vld [vmem:[%s0 + $0x18] sm:$0xf]
  %v27 = vld [vmem:[%s0 + $0x1c] sm:$0xf]
  %v28 = vld [vmem:[%s0 + $0x20] sm:$0xf]
  %v29 = vld [vmem:[%s0 + $0x24] sm:$0xf]
  %v30 = vld [vmem:[%s0 + $0x28] sm:$0xf]
  %v31 = vld [vmem:[%s0 + $0x2c] sm:$0xf]
  %v32 = vld [vmem:[%s0 + $0x30] sm:$0xf]
  %v33 = vld [vmem:[%s0 + $0x34] sm:$0xf]
  %v34 = vld [vmem:[%s0 + $0x38] sm:$0xf]
  %v35 = vld [vmem:[%s0 + $0x3c] sm:$0xf]
  %v36 = vld [vmem:[%s0 + $0x40] sm:$0xf]
  %v37 = vld [vmem:[%s0 + $0x44] sm:$0xf]
  %v38 = vld [vmem:[%s0 + $0x48] sm:$0xf]
  %v39 = vld [vmem:[%s0 + $0x4c] sm:$0xf]
  %v40 = vld [vmem:[%s0 + $0x50] sm:$0xf]
  %v41 = vld [vmem:[%s0 + $0x54] sm:$0xf]
  %v42 = vld [vmem:[%s0 + $0x58] sm:$0xf]
  %v43 = vld [vmem:[%s0 + $0x5c] sm:$0xf]
  %v44 = vld [vmem:[%s0 + $0x60] sm:$0xf]
  %v45 = vld [vmem:[%s0 + $0x64] sm:$0xf]
  %v46 = vld [vmem:[%s0 + $0x68] sm:$0xf]
  %v47 = vld [vmem:[%s0 + $0x6c] sm:$0xf]
  %v48 = vld [vmem:[%s0 + $0x70] sm:$0xf]
  %v49 = vld [vmem:[%s0 + $0x74] sm:$0xf]
  %v50 = vld [vmem:[%s0 + $0x78] sm:$0xf]
  %v51 = vld [vmem:[%s0 + $0x7c] sm:$0xf]
  %v52 = vld [vmem:[%s0 + $0x80] sm:$0xf]
  %v53 = vld [vmem:[%s0 + $0x84] sm:$0xf]
  %v54 = vld [vmem:[%s0 + $0x88] sm:$0xf]
  %v55 = vld [vmem:[%s0 + $0x8c] sm:$0xf]
  %v56 = vld [vmem:[%s0 + $0x90] sm:$0xf]
  %v57 = vld [vmem:[%s0 + $0x94] sm:$0xf]
  %v58 = vld [vmem:[%s0 + $0x98] sm:$0xf]
  %v59 = vld [vmem:[%s0 + $0x9c] sm:$0xf]
  %v60 = vld [vmem:[%s0 + $0xa0] sm:$0xf]
  %v61 = vld [vmem:[%s0 + $0xa4] sm:$0xf]
  %v62 = vld [vmem:[%s0 + $0xa8] sm:$0xf]
  %v63 = vld [vmem:[%s0 + $0xac] sm:$0xf]
  %v64 = vld [vmem:[%s0 + $0xb0] sm:$0xf]
  %v65 = vld [vmem:[%s0 + $0xb4] sm:$0xf]
  %v66 = vld [vmem:[%s0 + $0xb8] sm:$0xf]
  %v67 = vld [vmem:[%s0 + $0xbc] sm:$0xf]
  %v68 = vld [vmem:[%s0 + $0xc0] sm:$0xf]
  %v69 = vld [vmem:[%s0 + $0xc4] sm:$0xf]
  %v70 = vld [vmem:[%s0 + $0xc8] sm:$0xf]
  %v71 = vld [vmem:[%s0 + $0xcc] sm:$0xf]
  %v72 = vld [vmem:[%s0 + $0xd0] sm:$0xf]
  %v73 = vld [vmem:[%s0 + $0xd4] sm:$0xf]
  %v74 = vld [vmem:[%s0 + $0xd8] sm:$0xf]
  %v75 = vld [vmem:[%s0 + $0xdc] sm:$0xf]
  %v76 = vld [vmem:[%s0 + $0xe0] sm:$0xf]
  %v77 = vld [vmem:[%s0 + $0xe4] sm:$0xf]
  %v78 = vld [vmem:[%s0 + $0xe8] sm:$0xf]
  %v79 = vld [vmem:[%s0 + $0xec] sm:$0xf]
  %v80 = vld [vmem:[%s0 + $0xf0] sm:$0xf]
  %v81 = vld [vmem:[%s0 + $0xf4] sm:$0xf]
  %v82 = vld [vmem:[%s0 + $0xf8] sm:$0xf]
  %v83 = vld [vmem:[%s0 + $0xfc] sm:$0xf]
  %v148 = vunpack.c.l.b16 %v20
  %v149 = vunpack.c.l.b16 %v21
  %v150 = vunpack.c.l.b16 %v22
  %v151 = vunpack.c.l.b16 %v23
  %v152 = vunpack.c.l.b16 %v24
  %v153 = vunpack.c.l.b16 %v25
  %v154 = vunpack.c.l.b16 %v26
  %v155 = vunpack.c.l.b16 %v27
  %v156 = vunpack.c.l.b16 %v28
  %v157 = vunpack.c.l.b16 %v29
  %v158 = vunpack.c.l.b16 %v30
  %v159 = vunpack.c.l.b16 %v31
  %v160 = vunpack.c.l.b16 %v32
  %v161 = vunpack.c.l.b16 %v33
  %v162 = vunpack.c.l.b16 %v34
  %v163 = vunpack.c.l.b16 %v35
  %v164 = vunpack.c.l.b16 %v36
  %v165 = vunpack.c.l.b16 %v37
  %v166 = vunpack.c.l.b16 %v38
  %v167 = vunpack.c.l.b16 %v39
  %v168 = vunpack.c.l.b16 %v40
  %v169 = vunpack.c.l.b16 %v41
  %v170 = vunpack.c.l.b16 %v42
  %v171 = vunpack.c.l.b16 %v43
  %v172 = vunpack.c.l.b16 %v44
  %v173 = vunpack.c.l.b16 %v45
  %v174 = vunpack.c.l.b16 %v46
  %v175 = vunpack.c.l.b16 %v47
  %v176 = vunpack.c.l.b16 %v48
  %v177 = vunpack.c.l.b16 %v49
  %v178 = vunpack.c.l.b16 %v50
  %v179 = vunpack.c.l.b16 %v51
  %v180 = vunpack.c.l.b16 %v52
  %v181 = vunpack.c.l.b16 %v53
  %v182 = vunpack.c.l.b16 %v54
  %v183 = vunpack.c.l.b16 %v55
  %v184 = vunpack.c.l.b16 %v56
  %v185 = vunpack.c.l.b16 %v57
  %v186 = vunpack.c.l.b16 %v58
  %v187 = vunpack.c.l.b16 %v59
  %v188 = vunpack.c.l.b16 %v60
  %v189 = vunpack.c.l.b16 %v61
  %v190 = vunpack.c.l.b16 %v62
  %v191 = vunpack.c.l.b16 %v63
  %v192 = vunpack.c.l.b16 %v64
  %v193 = vunpack.c.l.b16 %v65
  %v194 = vunpack.c.l.b16 %v66
  %v195 = vunpack.c.l.b16 %v67
  %v196 = vunpack.c.l.b16 %v68
  %v197 = vunpack.c.l.b16 %v69
  %v198 = vunpack.c.l.b16 %v70
  %v199 = vunpack.c.l.b16 %v71
  %v200 = vunpack.c.l.b16 %v72
  %v201 = vunpack.c.l.b16 %v73
  %v202 = vunpack.c.l.b16 %v74
  %v203 = vunpack.c.l.b16 %v75
  %v204 = vunpack.c.l.b16 %v76
  %v205 = vunpack.c.l.b16 %v77
  %v206 = vunpack.c.l.b16 %v78
  %v207 = vunpack.c.l.b16 %v79
  %v208 = vunpack.c.l.b16 %v80
  %v209 = vunpack.c.l.b16 %v81
  %v210 = vunpack.c.l.b16 %v82
  %v211 = vunpack.c.l.b16 %v83
  %v212 = vpack.c.b16 %v149, %v148
  %v213 = vpack.c.b16 %v151, %v150
  %v214 = vpack.c.b16 %v153, %v152
  %v215 = vpack.c.b16 %v155, %v154
  %v216 = vpack.c.b16 %v157, %v156
  %v217 = vpack.c.b16 %v159, %v158
  %v218 = vpack.c.b16 %v161, %v160
  %v219 = vpack.c.b16 %v163, %v162
  %v220 = vpack.c.b16 %v165, %v164
  %v221 = vpack.c.b16 %v167, %v166
  %v222 = vpack.c.b16 %v169, %v168
  %v223 = vpack.c.b16 %v171, %v170
  %v224 = vpack.c.b16 %v173, %v172
  %v225 = vpack.c.b16 %v175, %v174
  %v226 = vpack.c.b16 %v177, %v176
  %v227 = vpack.c.b16 %v179, %v178
  %v228 = vpack.c.b16 %v181, %v180
  %v229 = vpack.c.b16 %v183, %v182
  %v230 = vpack.c.b16 %v185, %v184
  %v231 = vpack.c.b16 %v187, %v186
  %v232 = vpack.c.b16 %v189, %v188
  %v233 = vpack.c.b16 %v191, %v190
  %v234 = vpack.c.b16 %v193, %v192
  %v235 = vpack.c.b16 %v195, %v194
  %v236 = vpack.c.b16 %v197, %v196
  %v237 = vpack.c.b16 %v199, %v198
  %v238 = vpack.c.b16 %v201, %v200
  %v239 = vpack.c.b16 %v203, %v202
  %v240 = vpack.c.b16 %v205, %v204
  %v241 = vpack.c.b16 %v207, %v206
  %v242 = vpack.c.b16 %v209, %v208
  %v243 = vpack.c.b16 %v211, %v210
  %v249 = vunpack.c.l.b16 %v15
  %v250 = vunpack.c.l.b16 %v16
  %v251 = vunpack.c.l.b16 %v17
  %v252 = vunpack.c.l.b16 %v18
  %v253 = vunpack.c.l.b16 %v19
  %v254 = vpack.c.b16 %v250, %v249
  %v255 = vpack.c.b16 %v252, %v251
  %v256 = vpack.c.b16 %v253, %v253
  %vm259 = vcmask 293888
  %v261 = vsel %vm259, %v212, 0
  %v264 = vsel %vm259, %v213, 0
  %v267 = vsel %vm259, %v214, 0
  %v270 = vsel %vm259, %v215, 0
  %v273 = vsel %vm259, %v216, 0
  %v276 = vsel %vm259, %v217, 0
  %v279 = vsel %vm259, %v218, 0
  %v282 = vsel %vm259, %v219, 0
  %v285 = vsel %vm259, %v220, 0
  %v288 = vsel %vm259, %v221, 0
  %v291 = vsel %vm259, %v222, 0
  %v294 = vsel %vm259, %v223, 0
  %v297 = vsel %vm259, %v224, 0
  %v300 = vsel %vm259, %v225, 0
  %v303 = vsel %vm259, %v226, 0
  %v306 = vsel %vm259, %v227, 0
  %v309 = vsel %vm259, %v228, 0
  %v312 = vsel %vm259, %v229, 0
  %v315 = vsel %vm259, %v230, 0
  %v318 = vsel %vm259, %v231, 0
  %v321 = vsel %vm259, %v232, 0
  %v324 = vsel %vm259, %v233, 0
  %v327 = vsel %vm259, %v234, 0
  %v330 = vsel %vm259, %v235, 0
  %v333 = vsel %vm259, %v236, 0
  %v336 = vsel %vm259, %v237, 0
  %v339 = vsel %vm259, %v238, 0
  %v342 = vsel %vm259, %v239, 0
  %v345 = vsel %vm259, %v240, 0
  %v348 = vsel %vm259, %v241, 0
  %v351 = vsel %vm259, %v242, 0
  %v354 = vsel %vm259, %v243, 0
  %vm356 = vcmask 1041408
  %v358 = vsel %vm356, %v256, 0
  %360 = vmatprep.subr.bf16.mxu0 0
  %361 = vmatpush1.bf16.msra.mxu0 0
  %362 = vmatprep.subr.bf16.mxu0 0
  %363 = vmatpush1.bf16.msra.mxu0 0
  %364 = vmatprep.subr.bf16.mxu0 0
  %365 = vmatpush1.bf16.msra.mxu0 0
  %366 = vmatprep.subr.bf16.mxu0 0
  %367 = vmatpush1.bf16.msra.mxu0 0
  %368 = vmatprep.subr.bf16.mxu0 0
  %369 = vmatpush1.bf16.msra.mxu0 0
  %370 = vmatprep.subr.bf16.mxu0 0
  %371 = vmatpush1.bf16.msra.mxu0 %v358
  %372 = vmatprep.subr.bf16.mxu0 0
  %373 = vmatpush1.bf16.msra.mxu0 %v255
  %374 = vmatprep.subr.bf16.mxu0 0
  %375 = vmatpush1.bf16.msra.mxu0 %v254
  %376 = vmatprep.subr.bf16.mxu0 0
  %377 = vmatpush2.bf16.msra.mxu0 0
  %378 = vmatprep.subr.bf16.mxu0 0
  %379 = vmatpush2.bf16.msra.mxu0 0
  %380 = vmatprep.subr.bf16.mxu0 0
  %381 = vmatpush2.bf16.msra.mxu0 0
  %382 = vmatprep.subr.bf16.mxu0 0
  %383 = vmatpush2.bf16.msra.mxu0 0
  %384 = vmatprep.subr.bf16.mxu0 0
  %385 = vmatpush2.bf16.msra.mxu0 0
  %386 = vmatprep.subr.bf16.mxu0 0
  %387 = vmatpush2.bf16.msra.mxu0 0
  %388 = vmatprep.subr.bf16.mxu0 0
  %389 = vmatpush2.bf16.msra.mxu0 0
  %390 = vmatprep.subr.bf16.mxu0 0
  %391 = vmatpush2.bf16.msra.mxu0 0
  %392 = vmatprep.mubr.bf16.mxu0 0
  %393 = vmatmul.mubr.bf16.gmra.mxu0 %v261
  %v394 = vpop.f32.mrf.mxu0
  %v395 = vadd.f32 0.0, %v394
  %v396 = vpop.f32.mrf.mxu0
  %v397 = vpop.f32.mrf.mxu0
  %v398 = vadd.f32 0.0, %v397
  %v399 = vpop.f32.mrf.mxu0
  %400 = vmatprep.mubr.bf16.mxu0 0
  %401 = vmatmul.mubr.bf16.gmra.mxu0 %v264
  %v402 = vpop.f32.mrf.mxu0
  %v403 = vadd.f32 0.0, %v402
  %v404 = vpop.f32.mrf.mxu0
  %v405 = vpop.f32.mrf.mxu0
  %v406 = vadd.f32 0.0, %v405
  %v407 = vpop.f32.mrf.mxu0
  %408 = vmatprep.mubr.bf16.mxu0 0
  %409 = vmatmul.mubr.bf16.gmra.mxu0 %v267
  %v410 = vpop.f32.mrf.mxu0
  %v411 = vadd.f32 0.0, %v410
  %v412 = vpop.f32.mrf.mxu0
  %v413 = vpop.f32.mrf.mxu0
  %v414 = vadd.f32 0.0, %v413
  %v415 = vpop.f32.mrf.mxu0
  %416 = vmatprep.mubr.bf16.mxu0 0
  %417 = vmatmul.mubr.bf16.gmra.mxu0 %v270
  %v418 = vpop.f32.mrf.mxu0
  %v419 = vadd.f32 0.0, %v418
  %v420 = vpop.f32.mrf.mxu0
  %v421 = vpop.f32.mrf.mxu0
  %v422 = vadd.f32 0.0, %v421
  %v423 = vpop.f32.mrf.mxu0
  %424 = vmatprep.mubr.bf16.mxu0 0
  %425 = vmatmul.mubr.bf16.gmra.mxu0 %v273
  %v426 = vpop.f32.mrf.mxu0
  %v427 = vadd.f32 0.0, %v426
  %v428 = vpop.f32.mrf.mxu0
  %v429 = vpop.f32.mrf.mxu0
  %v430 = vadd.f32 0.0, %v429
  %v431 = vpop.f32.mrf.mxu0
  %432 = vmatprep.mubr.bf16.mxu0 0
  %433 = vmatmul.mubr.bf16.gmra.mxu0 %v276
  %v434 = vpop.f32.mrf.mxu0
  %v435 = vadd.f32 0.0, %v434
  %v436 = vpop.f32.mrf.mxu0
  %v437 = vpop.f32.mrf.mxu0
  %v438 = vadd.f32 0.0, %v437
  %v439 = vpop.f32.mrf.mxu0
  %440 = vmatprep.mubr.bf16.mxu0 0
  %441 = vmatmul.mubr.bf16.gmra.mxu0 %v279
  %v442 = vpop.f32.mrf.mxu0
  %v443 = vadd.f32 0.0, %v442
  %v444 = vpop.f32.mrf.mxu0
  %v445 = vpop.f32.mrf.mxu0
  %v446 = vadd.f32 0.0, %v445
  %v447 = vpop.f32.mrf.mxu0
  %448 = vmatprep.mubr.bf16.mxu0 0
  %449 = vmatmul.mubr.bf16.gmra.mxu0 %v282
  %v450 = vpop.f32.mrf.mxu0
  %v451 = vadd.f32 0.0, %v450
  %v452 = vpop.f32.mrf.mxu0
  %v453 = vpop.f32.mrf.mxu0
  %v454 = vadd.f32 0.0, %v453
  %v455 = vpop.f32.mrf.mxu0
  %456 = vmatprep.mubr.bf16.mxu0 0
  %457 = vmatmul.mubr.bf16.gmra.mxu0 %v285
  %v458 = vpop.f32.mrf.mxu0
  %v459 = vadd.f32 0.0, %v458
  %v460 = vpop.f32.mrf.mxu0
  %v461 = vpop.f32.mrf.mxu0
  %v462 = vadd.f32 0.0, %v461
  %v463 = vpop.f32.mrf.mxu0
  %464 = vmatprep.mubr.bf16.mxu0 0
  %465 = vmatmul.mubr.bf16.gmra.mxu0 %v288
  %v466 = vpop.f32.mrf.mxu0
  %v467 = vadd.f32 0.0, %v466
  %v468 = vpop.f32.mrf.mxu0
  %v469 = vpop.f32.mrf.mxu0
  %v470 = vadd.f32 0.0, %v469
  %v471 = vpop.f32.mrf.mxu0
  %472 = vmatprep.mubr.bf16.mxu0 0
  %473 = vmatmul.mubr.bf16.gmra.mxu0 %v291
  %v474 = vpop.f32.mrf.mxu0
  %v475 = vadd.f32 0.0, %v474
  %v476 = vpop.f32.mrf.mxu0
  %v477 = vpop.f32.mrf.mxu0
  %v478 = vadd.f32 0.0, %v477
  %v479 = vpop.f32.mrf.mxu0
  %480 = vmatprep.mubr.bf16.mxu0 0
  %481 = vmatmul.mubr.bf16.gmra.mxu0 %v294
  %v482 = vpop.f32.mrf.mxu0
  %v483 = vadd.f32 0.0, %v482
  %v484 = vpop.f32.mrf.mxu0
  %v485 = vpop.f32.mrf.mxu0
  %v486 = vadd.f32 0.0, %v485
  %v487 = vpop.f32.mrf.mxu0
  %488 = vmatprep.mubr.bf16.mxu0 0
  %489 = vmatmul.mubr.bf16.gmra.mxu0 %v297
  %v490 = vpop.f32.mrf.mxu0
  %v491 = vadd.f32 0.0, %v490
  %v492 = vpop.f32.mrf.mxu0
  %v493 = vpop.f32.mrf.mxu0
  %v494 = vadd.f32 0.0, %v493
  %v495 = vpop.f32.mrf.mxu0
  %496 = vmatprep.mubr.bf16.mxu0 0
  %497 = vmatmul.mubr.bf16.gmra.mxu0 %v300
  %v498 = vpop.f32.mrf.mxu0
  %v499 = vadd.f32 0.0, %v498
  %v500 = vpop.f32.mrf.mxu0
  %v501 = vpop.f32.mrf.mxu0
  %v502 = vadd.f32 0.0, %v501
  %v503 = vpop.f32.mrf.mxu0
  %504 = vmatprep.mubr.bf16.mxu0 0
  %505 = vmatmul.mubr.bf16.gmra.mxu0 %v303
  %v506 = vpop.f32.mrf.mxu0
  %v507 = vadd.f32 0.0, %v506
  %v508 = vpop.f32.mrf.mxu0
  %v509 = vpop.f32.mrf.mxu0
  %v510 = vadd.f32 0.0, %v509
  %v511 = vpop.f32.mrf.mxu0
  %512 = vmatprep.mubr.bf16.mxu0 0
  %513 = vmatmul.mubr.bf16.gmra.mxu0 %v306
  %v514 = vpop.f32.mrf.mxu0
  %v515 = vadd.f32 0.0, %v514
  %v516 = vpop.f32.mrf.mxu0
  %v517 = vpop.f32.mrf.mxu0
  %v518 = vadd.f32 0.0, %v517
  %v519 = vpop.f32.mrf.mxu0
  %520 = vmatprep.mubr.bf16.mxu0 0
  %521 = vmatmul.mubr.bf16.gmra.mxu0 %v309
  %v522 = vpop.f32.mrf.mxu0
  %v523 = vadd.f32 0.0, %v522
  %v524 = vpop.f32.mrf.mxu0
  %v525 = vpop.f32.mrf.mxu0
  %v526 = vadd.f32 0.0, %v525
  %v527 = vpop.f32.mrf.mxu0
  %528 = vmatprep.mubr.bf16.mxu0 0
  %529 = vmatmul.mubr.bf16.gmra.mxu0 %v312
  %v530 = vpop.f32.mrf.mxu0
  %v531 = vadd.f32 0.0, %v530
  %v532 = vpop.f32.mrf.mxu0
  %v533 = vpop.f32.mrf.mxu0
  %v534 = vadd.f32 0.0, %v533
  %v535 = vpop.f32.mrf.mxu0
  %536 = vmatprep.mubr.bf16.mxu0 0
  %537 = vmatmul.mubr.bf16.gmra.mxu0 %v315
  %v538 = vpop.f32.mrf.mxu0
  %v539 = vadd.f32 0.0, %v538
  %v540 = vpop.f32.mrf.mxu0
  %v541 = vpop.f32.mrf.mxu0
  %v542 = vadd.f32 0.0, %v541
  %v543 = vpop.f32.mrf.mxu0
  %544 = vmatprep.mubr.bf16.mxu0 0
  %545 = vmatmul.mubr.bf16.gmra.mxu0 %v318
  %v546 = vpop.f32.mrf.mxu0
  %v547 = vadd.f32 0.0, %v546
  %v548 = vpop.f32.mrf.mxu0
  %v549 = vpop.f32.mrf.mxu0
  %v550 = vadd.f32 0.0, %v549
  %v551 = vpop.f32.mrf.mxu0
  %552 = vmatprep.mubr.bf16.mxu0 0
  %553 = vmatmul.mubr.bf16.gmra.mxu0 %v321
  %v554 = vpop.f32.mrf.mxu0
  %v555 = vadd.f32 0.0, %v554
  %v556 = vpop.f32.mrf.mxu0
  %v557 = vpop.f32.mrf.mxu0
  %v558 = vadd.f32 0.0, %v557
  %v559 = vpop.f32.mrf.mxu0
  %560 = vmatprep.mubr.bf16.mxu0 0
  %561 = vmatmul.mubr.bf16.gmra.mxu0 %v324
  %v562 = vpop.f32.mrf.mxu0
  %v563 = vadd.f32 0.0, %v562
  %v564 = vpop.f32.mrf.mxu0
  %v565 = vpop.f32.mrf.mxu0
  %v566 = vadd.f32 0.0, %v565
  %v567 = vpop.f32.mrf.mxu0
  %568 = vmatprep.mubr.bf16.mxu0 0
  %569 = vmatmul.mubr.bf16.gmra.mxu0 %v327
  %v570 = vpop.f32.mrf.mxu0
  %v571 = vadd.f32 0.0, %v570
  %v572 = vpop.f32.mrf.mxu0
  %v573 = vpop.f32.mrf.mxu0
  %v574 = vadd.f32 0.0, %v573
  %v575 = vpop.f32.mrf.mxu0
  %576 = vmatprep.mubr.bf16.mxu0 0
  %577 = vmatmul.mubr.bf16.gmra.mxu0 %v330
  %v578 = vpop.f32.mrf.mxu0
  %v579 = vadd.f32 0.0, %v578
  %v580 = vpop.f32.mrf.mxu0
  %v581 = vpop.f32.mrf.mxu0
  %v582 = vadd.f32 0.0, %v581
  %v583 = vpop.f32.mrf.mxu0
  %584 = vmatprep.mubr.bf16.mxu0 0
  %585 = vmatmul.mubr.bf16.gmra.mxu0 %v333
  %v586 = vpop.f32.mrf.mxu0
  %v587 = vadd.f32 0.0, %v586
  %v588 = vpop.f32.mrf.mxu0
  %v589 = vpop.f32.mrf.mxu0
  %v590 = vadd.f32 0.0, %v589
  %v591 = vpop.f32.mrf.mxu0
  %592 = vmatprep.mubr.bf16.mxu0 0
  %593 = vmatmul.mubr.bf16.gmra.mxu0 %v336
  %v594 = vpop.f32.mrf.mxu0
  %v595 = vadd.f32 0.0, %v594
  %v596 = vpop.f32.mrf.mxu0
  %v597 = vpop.f32.mrf.mxu0
  %v598 = vadd.f32 0.0, %v597
  %v599 = vpop.f32.mrf.mxu0
  %600 = vmatprep.mubr.bf16.mxu0 0
  %601 = vmatmul.mubr.bf16.gmra.mxu0 %v339
  %v602 = vpop.f32.mrf.mxu0
  %v603 = vadd.f32 0.0, %v602
  %v604 = vpop.f32.mrf.mxu0
  %v605 = vpop.f32.mrf.mxu0
  %v606 = vadd.f32 0.0, %v605
  %v607 = vpop.f32.mrf.mxu0
  %608 = vmatprep.mubr.bf16.mxu0 0
  %609 = vmatmul.mubr.bf16.gmra.mxu0 %v342
  %v610 = vpop.f32.mrf.mxu0
  %v611 = vadd.f32 0.0, %v610
  %v612 = vpop.f32.mrf.mxu0
  %v613 = vpop.f32.mrf.mxu0
  %v614 = vadd.f32 0.0, %v613
  %v615 = vpop.f32.mrf.mxu0
  %616 = vmatprep.mubr.bf16.mxu0 0
  %617 = vmatmul.mubr.bf16.gmra.mxu0 %v345
  %v618 = vpop.f32.mrf.mxu0
  %v619 = vadd.f32 0.0, %v618
  %v620 = vpop.f32.mrf.mxu0
  %v621 = vpop.f32.mrf.mxu0
  %v622 = vadd.f32 0.0, %v621
  %v623 = vpop.f32.mrf.mxu0
  %624 = vmatprep.mubr.bf16.mxu0 0
  %625 = vmatmul.mubr.bf16.gmra.mxu0 %v348
  %v626 = vpop.f32.mrf.mxu0
  %v627 = vadd.f32 0.0, %v626
  %v628 = vpop.f32.mrf.mxu0
  %v629 = vpop.f32.mrf.mxu0
  %v630 = vadd.f32 0.0, %v629
  %v631 = vpop.f32.mrf.mxu0
  %632 = vmatprep.mubr.bf16.mxu0 0
  %633 = vmatmul.mubr.bf16.gmra.mxu0 %v351
  %v634 = vpop.f32.mrf.mxu0
  %v635 = vadd.f32 0.0, %v634
  %v636 = vpop.f32.mrf.mxu0
  %v637 = vpop.f32.mrf.mxu0
  %v638 = vadd.f32 0.0, %v637
  %v639 = vpop.f32.mrf.mxu0
  %640 = vmatprep.mubr.bf16.mxu0 0
  %641 = vmatmul.mubr.bf16.gmra.mxu0 %v354
  %v642 = vpop.f32.mrf.mxu0
  %v643 = vadd.f32 0.0, %v642
  %v644 = vpop.f32.mrf.mxu0
  %v645 = vpop.f32.mrf.mxu0
  %v646 = vadd.f32 0.0, %v645
  %v647 = vpop.f32.mrf.mxu0
  %648 = vdwg.mxu0
  %v649 = vmax.f32 %v395, %v459
  %v650 = vmax.f32 %v398, %v462
  %v651 = vmax.f32 %v403, %v467
  %v652 = vmax.f32 %v406, %v470
  %v653 = vmax.f32 %v411, %v475
  %v654 = vmax.f32 %v414, %v478
  %v655 = vmax.f32 %v419, %v483
  %v656 = vmax.f32 %v422, %v486
  %v657 = vmax.f32 %v427, %v491
  %v658 = vmax.f32 %v430, %v494
  %v659 = vmax.f32 %v435, %v499
  %v660 = vmax.f32 %v438, %v502
  %v661 = vmax.f32 %v443, %v507
  %v662 = vmax.f32 %v446, %v510
  %v663 = vmax.f32 %v451, %v515
  %v664 = vmax.f32 %v454, %v518
  %v665 = vmax.f32 %v523, %v587
  %v666 = vmax.f32 %v526, %v590
  %v667 = vmax.f32 %v531, %v595
  %v668 = vmax.f32 %v534, %v598
  %v669 = vmax.f32 %v539, %v603
  %v670 = vmax.f32 %v542, %v606
  %v671 = vmax.f32 %v547, %v611
  %v672 = vmax.f32 %v550, %v614
  %v673 = vmax.f32 %v555, %v619
  %v674 = vmax.f32 %v558, %v622
  %v675 = vmax.f32 %v563, %v627
  %v676 = vmax.f32 %v566, %v630
  %v677 = vmax.f32 %v571, %v635
  %v678 = vmax.f32 %v574, %v638
  %v679 = vmax.f32 %v579, %v643
  %v680 = vmax.f32 %v582, %v646
  %v681 = vmax.f32 %v649, %v665
  %v682 = vmax.f32 %v650, %v666
  %v683 = vmax.f32 %v651, %v667
  %v684 = vmax.f32 %v652, %v668
  %v685 = vmax.f32 %v653, %v669
  %v686 = vmax.f32 %v654, %v670
  %v687 = vmax.f32 %v655, %v671
  %v688 = vmax.f32 %v656, %v672
  %v689 = vmax.f32 %v657, %v673
  %v690 = vmax.f32 %v658, %v674
  %v691 = vmax.f32 %v659, %v675
  %v692 = vmax.f32 %v660, %v676
  %v693 = vmax.f32 %v661, %v677
  %v694 = vmax.f32 %v662, %v678
  %v695 = vmax.f32 %v663, %v679
  %v696 = vmax.f32 %v664, %v680
  %v697 = vld [vmem:[%s2] sm:$0x1]
  %v699 = vlaneseq
  %v700 = vshrl.u32 %v699, 7
  %v701 = vsub.s32 0, %v700
  %v702 = vrot.slane %v697, %v701
  %v704 = vadd.f32 %v681, %v702
  %v705 = vadd.f32 %v682, %v702
  %v706 = vadd.f32 %v683, %v702
  %v707 = vadd.f32 %v684, %v702
  %v708 = vadd.f32 %v685, %v702
  %v709 = vadd.f32 %v686, %v702
  %v710 = vadd.f32 %v687, %v702
  %v711 = vadd.f32 %v688, %v702
  %v712 = vadd.f32 %v689, %v702
  %v713 = vadd.f32 %v690, %v702
  %v714 = vadd.f32 %v691, %v702
  %v715 = vadd.f32 %v692, %v702
  %v716 = vadd.f32 %v693, %v702
  %v717 = vadd.f32 %v694, %v702
  %v718 = vadd.f32 %v695, %v702
  %v719 = vadd.f32 %v696, %v702
  %v720 = vmax.f32 %v704, 0.0
  %v721 = vmax.f32 %v705, 0.0
  %v722 = vmax.f32 %v706, 0.0
  %v723 = vmax.f32 %v707, 0.0
  %v724 = vmax.f32 %v708, 0.0
  %v725 = vmax.f32 %v709, 0.0
  %v726 = vmax.f32 %v710, 0.0
  %v727 = vmax.f32 %v711, 0.0
  %v728 = vmax.f32 %v712, 0.0
  %v729 = vmax.f32 %v713, 0.0
  %v730 = vmax.f32 %v714, 0.0
  %v731 = vmax.f32 %v715, 0.0
  %v732 = vmax.f32 %v716, 0.0
  %v733 = vmax.f32 %v717, 0.0
  %v734 = vmax.f32 %v718, 0.0
  %v735 = vmax.f32 %v719, 0.0
  %v736 = vpack.c.bf16 %v721, %v720
  %v737 = vpack.c.bf16 %v723, %v722
  %v738 = vpack.c.bf16 %v725, %v724
  %v739 = vpack.c.bf16 %v727, %v726
  %v740 = vpack.c.bf16 %v729, %v728
  %v741 = vpack.c.bf16 %v731, %v730
  %v742 = vpack.c.bf16 %v733, %v732
  %v743 = vpack.c.bf16 %v735, %v734
  %v752 = vunpack.c.l.b16 %v736
  %v753 = vunpack.c.h.b16 %v736
  %v754 = vunpack.c.l.b16 %v737
  %v755 = vunpack.c.h.b16 %v737
  %v756 = vunpack.c.l.b16 %v738
  %v757 = vunpack.c.h.b16 %v738
  %v758 = vunpack.c.l.b16 %v739
  %v759 = vunpack.c.h.b16 %v739
  %v760 = vunpack.c.l.b16 %v740
  %v761 = vunpack.c.h.b16 %v740
  %v762 = vunpack.c.l.b16 %v741
  %v763 = vunpack.c.h.b16 %v741
  %v764 = vunpack.c.l.b16 %v742
  %v765 = vunpack.c.h.b16 %v742
  %v766 = vunpack.c.l.b16 %v743
  %v767 = vunpack.c.h.b16 %v743
  %v768 = vpack.c.b16 %v752, %v752
  %v769 = vpack.c.b16 %v753, %v753
  %v770 = vpack.c.b16 %v754, %v754
  %v771 = vpack.c.b16 %v755, %v755
  %v772 = vpack.c.b16 %v756, %v756
  %v773 = vpack.c.b16 %v757, %v757
  %v774 = vpack.c.b16 %v758, %v758
  %v775 = vpack.c.b16 %v759, %v759
  %v776 = vpack.c.b16 %v760, %v760
  %v777 = vpack.c.b16 %v761, %v761
  %v778 = vpack.c.b16 %v762, %v762
  %v779 = vpack.c.b16 %v763, %v763
  %v780 = vpack.c.b16 %v764, %v764
  %v781 = vpack.c.b16 %v765, %v765
  %v782 = vpack.c.b16 %v766, %v766
  %v783 = vpack.c.b16 %v767, %v767
  %vm800 = vcmask 257024
  %801 = vst.msk [vmem:[%s3] sm:$0xf] %vm800, %v768
  %802 = vst.msk [vmem:[%s3 + $0x4] sm:$0xf] %vm800, %v769
  %803 = vst.msk [vmem:[%s3 + $0x8] sm:$0xf] %vm800, %v770
  %804 = vst.msk [vmem:[%s3 + $0xc] sm:$0xf] %vm800, %v771
  %805 = vst.msk [vmem:[%s3 + $0x10] sm:$0xf] %vm800, %v772
  %806 = vst.msk [vmem:[%s3 + $0x14] sm:$0xf] %vm800, %v773
  %807 = vst.msk [vmem:[%s3 + $0x18] sm:$0xf] %vm800, %v774
  %808 = vst.msk [vmem:[%s3 + $0x1c] sm:$0xf] %vm800, %v775
  %809 = vst.msk [vmem:[%s3 + $0x20] sm:$0xf] %vm800, %v776
  %810 = vst.msk [vmem:[%s3 + $0x24] sm:$0xf] %vm800, %v777
  %811 = vst.msk [vmem:[%s3 + $0x28] sm:$0xf] %vm800, %v778
  %812 = vst.msk [vmem:[%s3 + $0x2c] sm:$0xf] %vm800, %v779
  %813 = vst.msk [vmem:[%s3 + $0x30] sm:$0xf] %vm800, %v780
  %814 = vst.msk [vmem:[%s3 + $0x34] sm:$0xf] %vm800, %v781
  %815 = vst.msk [vmem:[%s3 + $0x38] sm:$0xf] %vm800, %v782
  %816 = vst.msk [vmem:[%s3 + $0x3c] sm:$0xf] %vm800, %v783
  // Predicated region
  $region14: #{encoder_forward.4} parent=0 // pred_check
    _
  $region15: #{encoder_forward.4} parent=0 // pred_check_branch
    %818 = sbr.rel (0) target = $region17
  $region16: #{encoder_forward.4} parent=0 // pred_region
    _
  $region17: #{encoder_forward.4} parent=0 // pred_fallthru
    _
  // Predicated region
  $region18: #{encoder_forward.4} parent=0 // pred_check
    _
  $region19: #{encoder_forward.4} parent=0 // pred_check_branch
    %820 = sbr.rel (0) target = $region21
  $region20: #{encoder_forward.4} parent=0 // pred_region
    _
  $region21: #{encoder_forward.4} parent=0 // pred_fallthru
    _

// kernel: encoder_forward.5
$region0: #{encoder_forward.5}
  #allocation0 [shape = 'u32[]', space=smem, size = 0x4, offset = 0x4, fixed_abs, tag = 'smem constant byte address 0x4 - core index']
  #allocation1 [shape = 'u32[144,128]{1,0:T(1,128)}', space=vmem, size = 0x12000, scoped, tag = 'internal scratch']
  %s0 = inlined_call_operand.vmem [shape: bf16[4,32,288], index: 0, kind: input, shape index: {}]
  %s1 = inlined_call_operand.vmem [shape: bf16[288,64], index: 1, kind: input, shape index: {}]
  %s2 = inlined_call_operand.vmem [shape: f32[1,64], index: 2, kind: input, shape index: {}]
  %s3 = inlined_call_operand.vmem [shape: bf16[32,64], index: 3, kind: output, shape index: {}]
  %s4 = sld [smem:[#allocation0]]
  $region22: #{encoder_forward.5} parent=0
    _
  %s6 = ssub.s32 1, %s4
  %s7 = scalar_select 0, %s6, %s4
  // Predicated region
  $region2: #{encoder_forward.5} parent=0 // pred_check
    _
  $region3: #{encoder_forward.5} parent=0 // pred_check_branch
    %9 = sbr.rel (0) target = $region5
  $region4: #{encoder_forward.5} parent=0 // pred_region
    _
  $region5: #{encoder_forward.5} parent=0 // pred_fallthru
    _
  // Predicated region
  $region6: #{encoder_forward.5} parent=0 // pred_check
    _
  $region7: #{encoder_forward.5} parent=0 // pred_check_branch
    %11 = sbr.rel (0) target = $region9
  $region8: #{encoder_forward.5} parent=0 // pred_region
    _
  $region9: #{encoder_forward.5} parent=0 // pred_fallthru
    _
  // Predicated region
  $region10: #{encoder_forward.5} parent=0 // pred_check
    _
  $region11: #{encoder_forward.5} parent=0 // pred_check_branch
    %13 = sbr.rel (0) target = $region13
  $region12: #{encoder_forward.5} parent=0 // pred_region
    _
  $region13: #{encoder_forward.5} parent=0 // pred_fallthru
    _
  %v15 = vld [vmem:[%s1] sm:$0xf]
  %v16 = vld [vmem:[%s1 + $0x4] sm:$0xf]
  %v17 = vld [vmem:[%s1 + $0x8] sm:$0xf]
  %v18 = vld [vmem:[%s1 + $0xc] sm:$0xf]
  %v19 = vld [vmem:[%s1 + $0x10] sm:$0xf]
  %v20 = vld [vmem:[%s1 + $0x14] sm:$0xf]
  %v21 = vld [vmem:[%s1 + $0x18] sm:$0xf]
  %v22 = vld [vmem:[%s1 + $0x1c] sm:$0xf]
  %v23 = vld [vmem:[%s1 + $0x20] sm:$0xf]
  %v24 = vld [vmem:[%s1 + $0x24] sm:$0xf]
  %v25 = vld [vmem:[%s1 + $0x28] sm:$0xf]
  %v26 = vld [vmem:[%s1 + $0x2c] sm:$0xf]
  %v27 = vld [vmem:[%s1 + $0x30] sm:$0xf]
  %v28 = vld [vmem:[%s1 + $0x34] sm:$0xf]
  %v29 = vld [vmem:[%s1 + $0x38] sm:$0xf]
  %v30 = vld [vmem:[%s1 + $0x3c] sm:$0xf]
  %v31 = vld [vmem:[%s1 + $0x40] sm:$0xf]
  %v32 = vld [vmem:[%s1 + $0x44] sm:$0xf]
  %v33 = vld [vmem:[%s1 + $0x48] sm:$0xf]
  %v34 = vld [vmem:[%s1 + $0x4c] sm:$0xf]
  %v35 = vld [vmem:[%s1 + $0x50] sm:$0xf]
  %v36 = vld [vmem:[%s1 + $0x54] sm:$0xf]
  %v37 = vld [vmem:[%s1 + $0x58] sm:$0xf]
  %v38 = vld [vmem:[%s1 + $0x5c] sm:$0xf]
  %v39 = vld [vmem:[%s1 + $0x60] sm:$0xf]
  %v40 = vld [vmem:[%s1 + $0x64] sm:$0xf]
  %v41 = vld [vmem:[%s1 + $0x68] sm:$0xf]
  %v42 = vld [vmem:[%s1 + $0x6c] sm:$0xf]
  %v43 = vld [vmem:[%s1 + $0x70] sm:$0xf]
  %v44 = vld [vmem:[%s1 + $0x74] sm:$0xf]
  %v45 = vld [vmem:[%s1 + $0x78] sm:$0xf]
  %v46 = vld [vmem:[%s1 + $0x7c] sm:$0xf]
  %v47 = vld [vmem:[%s1 + $0x80] sm:$0xf]
  %v48 = vld [vmem:[%s1 + $0x84] sm:$0xf]
  %v49 = vld [vmem:[%s1 + $0x88] sm:$0xf]
  %v50 = vld [vmem:[%s1 + $0x8c] sm:$0xf]
  %v51 = vld [vmem:[%s0] sm:$0xff]
  %v52 = vld [vmem:[%s0 + $0x8] sm:$0xf]
  %v53 = vld [vmem:[%s0 + $0xc] sm:$0xff]
  %v54 = vld [vmem:[%s0 + $0x14] sm:$0xf]
  %v55 = vld [vmem:[%s0 + $0x18] sm:$0xff]
  %v56 = vld [vmem:[%s0 + $0x20] sm:$0xf]
  %v57 = vld [vmem:[%s0 + $0x24] sm:$0xff]
  %v58 = vld [vmem:[%s0 + $0x2c] sm:$0xf]
  %v59 = vld [vmem:[%s0 + $0x30] sm:$0xff]
  %v60 = vld [vmem:[%s0 + $0x38] sm:$0xf]
  %v61 = vld [vmem:[%s0 + $0x3c] sm:$0xff]
  %v62 = vld [vmem:[%s0 + $0x44] sm:$0xf]
  %v63 = vld [vmem:[%s0 + $0x48] sm:$0xff]
  %v64 = vld [vmem:[%s0 + $0x50] sm:$0xf]
  %v65 = vld [vmem:[%s0 + $0x54] sm:$0xff]
  %v66 = vld [vmem:[%s0 + $0x5c] sm:$0xf]
  %v67 = vld [vmem:[%s0 + $0x60] sm:$0xff]
  %v68 = vld [vmem:[%s0 + $0x68] sm:$0xf]
  %v69 = vld [vmem:[%s0 + $0x6c] sm:$0xff]
  %v70 = vld [vmem:[%s0 + $0x74] sm:$0xf]
  %v71 = vld [vmem:[%s0 + $0x78] sm:$0xff]
  %v72 = vld [vmem:[%s0 + $0x80] sm:$0xf]
  %v73 = vld [vmem:[%s0 + $0x84] sm:$0xff]
  %v74 = vld [vmem:[%s0 + $0x8c] sm:$0xf]
  %v75 = vld [vmem:[%s0 + $0x90] sm:$0xff]
  %v76 = vld [vmem:[%s0 + $0x98] sm:$0xf]
  %v77 = vld [vmem:[%s0 + $0x9c] sm:$0xff]
  %v78 = vld [vmem:[%s0 + $0xa4] sm:$0xf]
  %v79 = vld [vmem:[%s0 + $0xa8] sm:$0xff]
  %v80 = vld [vmem:[%s0 + $0xb0] sm:$0xf]
  %v81 = vld [vmem:[%s0 + $0xb4] sm:$0xff]
  %v82 = vld [vmem:[%s0 + $0xbc] sm:$0xf]
  %v115 = vunpack.c.l.b16 %v51
  %v116 = vunpack.c.h.b16 %v51
  %v117 = vunpack.c.l.b16 %v52
  %v118 = vunpack.c.l.b16 %v53
  %v119 = vunpack.c.h.b16 %v53
  %v120 = vunpack.c.l.b16 %v54
  %v121 = vunpack.c.l.b16 %v55
  %v122 = vunpack.c.h.b16 %v55
  %v123 = vunpack.c.l.b16 %v56
  %v124 = vunpack.c.l.b16 %v57
  %v125 = vunpack.c.h.b16 %v57
  %v126 = vunpack.c.l.b16 %v58
  %v127 = vunpack.c.l.b16 %v59
  %v128 = vunpack.c.h.b16 %v59
  %v129 = vunpack.c.l.b16 %v60
  %v130 = vunpack.c.l.b16 %v61
  %v131 = vunpack.c.h.b16 %v61
  %v132 = vunpack.c.l.b16 %v62
  %v133 = vunpack.c.l.b16 %v63
  %v134 = vunpack.c.h.b16 %v63
  %v135 = vunpack.c.l.b16 %v64
  %v136 = vunpack.c.l.b16 %v65
  %v137 = vunpack.c.h.b16 %v65
  %v138 = vunpack.c.l.b16 %v66
  %v139 = vunpack.c.l.b16 %v67
  %v140 = vunpack.c.h.b16 %v67
  %v141 = vunpack.c.l.b16 %v68
  %v142 = vunpack.c.l.b16 %v69
  %v143 = vunpack.c.h.b16 %v69
  %v144 = vunpack.c.l.b16 %v70
  %v145 = vunpack.c.l.b16 %v71
  %v146 = vunpack.c.h.b16 %v71
  %v147 = vunpack.c.l.b16 %v72
  %v148 = vunpack.c.l.b16 %v73
  %v149 = vunpack.c.h.b16 %v73
  %v150 = vunpack.c.l.b16 %v74
  %v151 = vunpack.c.l.b16 %v75
  %v152 = vunpack.c.h.b16 %v75
  %v153 = vunpack.c.l.b16 %v76
  %v154 = vunpack.c.l.b16 %v77
  %v155 = vunpack.c.h.b16 %v77
  %v156 = vunpack.c.l.b16 %v78
  %v157 = vunpack.c.l.b16 %v79
  %v158 = vunpack.c.h.b16 %v79
  %v159 = vunpack.c.l.b16 %v80
  %v160 = vunpack.c.l.b16 %v81
  %v161 = vunpack.c.h.b16 %v81
  %v162 = vunpack.c.l.b16 %v82
  %v163 = vpack.c.b16 %v118, %v115
  %v164 = vpack.c.b16 %v119, %v116
  %v165 = vpack.c.b16 %v120, %v117
  %v166 = vpack.c.b16 %v124, %v121
  %v167 = vpack.c.b16 %v125, %v122
  %v168 = vpack.c.b16 %v126, %v123
  %v169 = vpack.c.b16 %v130, %v127
  %v170 = vpack.c.b16 %v131, %v128
  %v171 = vpack.c.b16 %v132, %v129
  %v172 = vpack.c.b16 %v136, %v133
  %v173 = vpack.c.b16 %v137, %v134
  %v174 = vpack.c.b16 %v138, %v135
  %v175 = vpack.c.b16 %v142, %v139
  %v176 = vpack.c.b16 %v143, %v140
  %v177 = vpack.c.b16 %v144, %v141
  %v178 = vpack.c.b16 %v148, %v145
  %v179 = vpack.c.b16 %v149, %v146
  %v180 = vpack.c.b16 %v150, %v147
  %v181 = vpack.c.b16 %v154, %v151
  %v182 = vpack.c.b16 %v155, %v152
  %v183 = vpack.c.b16 %v156, %v153
  %v184 = vpack.c.b16 %v160, %v157
  %v185 = vpack.c.b16 %v161, %v158
  %v186 = vpack.c.b16 %v162, %v159
  %v239 = vunpack.c.l.b16 %v15
  %v240 = vunpack.c.l.b16 %v16
  %v241 = vunpack.c.l.b16 %v17
  %v242 = vunpack.c.l.b16 %v18
  %v243 = vunpack.c.l.b16 %v19
  %v244 = vunpack.c.l.b16 %v20
  %v245 = vunpack.c.l.b16 %v21
  %v246 = vunpack.c.l.b16 %v22
  %v247 = vunpack.c.l.b16 %v23
  %v248 = vunpack.c.l.b16 %v24
  %v249 = vunpack.c.l.b16 %v25
  %v250 = vunpack.c.l.b16 %v26
  %v251 = vunpack.c.l.b16 %v27
  %v252 = vunpack.c.l.b16 %v28
  %v253 = vunpack.c.l.b16 %v29
  %v254 = vunpack.c.l.b16 %v30
  %v255 = vunpack.c.l.b16 %v31
  %v256 = vunpack.c.l.b16 %v32
  %v257 = vunpack.c.l.b16 %v33
  %v258 = vunpack.c.l.b16 %v34
  %v259 = vunpack.c.l.b16 %v35
  %v260 = vunpack.c.l.b16 %v36
  %v261 = vunpack.c.l.b16 %v37
  %v262 = vunpack.c.l.b16 %v38
  %v263 = vunpack.c.l.b16 %v39
  %v264 = vunpack.c.l.b16 %v40
  %v265 = vunpack.c.l.b16 %v41
  %v266 = vunpack.c.l.b16 %v42
  %v267 = vunpack.c.l.b16 %v43
  %v268 = vunpack.c.l.b16 %v44
  %v269 = vunpack.c.l.b16 %v45
  %v270 = vunpack.c.l.b16 %v46
  %v271 = vunpack.c.l.b16 %v47
  %v272 = vunpack.c.l.b16 %v48
  %v273 = vunpack.c.l.b16 %v49
  %v274 = vunpack.c.l.b16 %v50
  %v275 = vpack.c.b16 %v240, %v239
  %v276 = vpack.c.b16 %v242, %v241
  %v277 = vpack.c.b16 %v244, %v243
  %v278 = vpack.c.b16 %v246, %v245
  %v279 = vpack.c.b16 %v248, %v247
  %v280 = vpack.c.b16 %v250, %v249
  %v281 = vpack.c.b16 %v252, %v251
  %v282 = vpack.c.b16 %v254, %v253
  %v283 = vpack.c.b16 %v256, %v255
  %v284 = vpack.c.b16 %v258, %v257
  %v285 = vpack.c.b16 %v260, %v259
  %v286 = vpack.c.b16 %v262, %v261
  %v287 = vpack.c.b16 %v264, %v263
  %v288 = vpack.c.b16 %v266, %v265
  %v289 = vpack.c.b16 %v268, %v267
  %v290 = vpack.c.b16 %v270, %v269
  %v291 = vpack.c.b16 %v272, %v271
  %v292 = vpack.c.b16 %v274, %v273
  %vm311 = vcmask 261120
  %v313 = vsel %vm311, %v165, 0
  %v316 = vsel %vm311, %v168, 0
  %v319 = vsel %vm311, %v171, 0
  %v322 = vsel %vm311, %v174, 0
  %v325 = vsel %vm311, %v177, 0
  %v328 = vsel %vm311, %v180, 0
  %v331 = vsel %vm311, %v183, 0
  %v334 = vsel %vm311, %v186, 0
  %336 = vmatprep.subr.bf16.mxu0 0
  %337 = vmatpush1.bf16.msra.mxu0 %v282
  %338 = vmatprep.subr.bf16.mxu0 0
  %339 = vmatpush1.bf16.msra.mxu0 %v281
  %340 = vmatprep.subr.bf16.mxu0 0
  %341 = vmatpush1.bf16.msra.mxu0 %v280
  %342 = vmatprep.subr.bf16.mxu0 0
  %343 = vmatpush1.bf16.msra.mxu0 %v279
  %344 = vmatprep.subr.bf16.mxu0 0
  %345 = vmatpush1.bf16.msra.mxu0 %v278
  %346 = vmatprep.subr.bf16.mxu0 0
  %347 = vmatpush1.bf16.msra.mxu0 %v277
  %348 = vmatprep.subr.bf16.mxu0 0
  %349 = vmatpush1.bf16.msra.mxu0 %v276
  %350 = vmatprep.subr.bf16.mxu0 0
  %351 = vmatpush1.bf16.msra.mxu0 %v275
  %352 = vmatprep.subr.bf16.mxu0 0
  %353 = vmatpush2.bf16.msra.mxu0 %v290
  %354 = vmatprep.subr.bf16.mxu0 0
  %355 = vmatpush2.bf16.msra.mxu0 %v289
  %356 = vmatprep.subr.bf16.mxu0 0
  %357 = vmatpush2.bf16.msra.mxu0 %v288
  %358 = vmatprep.subr.bf16.mxu0 0
  %359 = vmatpush2.bf16.msra.mxu0 %v287
  %360 = vmatprep.subr.bf16.mxu0 0
  %361 = vmatpush2.bf16.msra.mxu0 %v286
  %362 = vmatprep.subr.bf16.mxu0 0
  %363 = vmatpush2.bf16.msra.mxu0 %v285
  %364 = vmatprep.subr.bf16.mxu0 0
  %365 = vmatpush2.bf16.msra.mxu0 %v284
  %366 = vmatprep.subr.bf16.mxu0 0
  %367 = vmatpush2.bf16.msra.mxu0 %v283
  %368 = vmatprep.mubr.bf16.mxu0 %v164
  %369 = vmatmul.mubr.bf16.gmra.mxu0 %v163
  %v370 = vpop.f32.mrf.mxu0
  %v371 = vadd.f32 0.0, %v370
  %v372 = vpop.f32.mrf.mxu0
  %v373 = vpop.f32.mrf.mxu0
  %v374 = vadd.f32 0.0, %v373
  %v375 = vpop.f32.mrf.mxu0
  %376 = vmatprep.mubr.bf16.mxu0 %v167
  %377 = vmatmul.mubr.bf16.gmra.mxu0 %v166
  %v378 = vpop.f32.mrf.mxu0
  %v379 = vadd.f32 0.0, %v378
  %v380 = vpop.f32.mrf.mxu0
  %v381 = vpop.f32.mrf.mxu0
  %v382 = vadd.f32 0.0, %v381
  %v383 = vpop.f32.mrf.mxu0
  %384 = vmatprep.mubr.bf16.mxu0 %v170
  %385 = vmatmul.mubr.bf16.gmra.mxu0 %v169
  %v386 = vpop.f32.mrf.mxu0
  %v387 = vadd.f32 0.0, %v386
  %v388 = vpop.f32.mrf.mxu0
  %v389 = vpop.f32.mrf.mxu0
  %v390 = vadd.f32 0.0, %v389
  %v391 = vpop.f32.mrf.mxu0
  %392 = vmatprep.mubr.bf16.mxu0 %v173
  %393 = vmatmul.mubr.bf16.gmra.mxu0 %v172
  %v394 = vpop.f32.mrf.mxu0
  %v395 = vadd.f32 0.0, %v394
  %v396 = vpop.f32.mrf.mxu0
  %v397 = vpop.f32.mrf.mxu0
  %v398 = vadd.f32 0.0, %v397
  %v399 = vpop.f32.mrf.mxu0
  %400 = vmatprep.mubr.bf16.mxu0 %v176
  %401 = vmatmul.mubr.bf16.gmra.mxu0 %v175
  %v402 = vpop.f32.mrf.mxu0
  %v403 = vadd.f32 0.0, %v402
  %v404 = vpop.f32.mrf.mxu0
  %v405 = vpop.f32.mrf.mxu0
  %v406 = vadd.f32 0.0, %v405
  %v407 = vpop.f32.mrf.mxu0
  %408 = vmatprep.mubr.bf16.mxu0 %v179
  %409 = vmatmul.mubr.bf16.gmra.mxu0 %v178
  %v410 = vpop.f32.mrf.mxu0
  %v411 = vadd.f32 0.0, %v410
  %v412 = vpop.f32.mrf.mxu0
  %v413 = vpop.f32.mrf.mxu0
  %v414 = vadd.f32 0.0, %v413
  %v415 = vpop.f32.mrf.mxu0
  %416 = vmatprep.mubr.bf16.mxu0 %v182
  %417 = vmatmul.mubr.bf16.gmra.mxu0 %v181
  %v418 = vpop.f32.mrf.mxu0
  %v419 = vadd.f32 0.0, %v418
  %v420 = vpop.f32.mrf.mxu0
  %v421 = vpop.f32.mrf.mxu0
  %v422 = vadd.f32 0.0, %v421
  %v423 = vpop.f32.mrf.mxu0
  %424 = vmatprep.mubr.bf16.mxu0 %v185
  %425 = vmatmul.mubr.bf16.gmra.mxu0 %v184
  %v426 = vpop.f32.mrf.mxu0
  %v427 = vadd.f32 0.0, %v426
  %v428 = vpop.f32.mrf.mxu0
  %v429 = vpop.f32.mrf.mxu0
  %v430 = vadd.f32 0.0, %v429
  %v431 = vpop.f32.mrf.mxu0
  %432 = vdwg.mxu0
  %433 = vmatprep.subr.bf16.mxu0 0
  %434 = vmatpush1.bf16.msra.mxu0 0
  %435 = vmatprep.subr.bf16.mxu0 0
  %436 = vmatpush1.bf16.msra.mxu0 0
  %437 = vmatprep.subr.bf16.mxu0 0
  %438 = vmatpush1.bf16.msra.mxu0 0
  %439 = vmatprep.subr.bf16.mxu0 0
  %440 = vmatpush1.bf16.msra.mxu0 0
  %441 = vmatprep.subr.bf16.mxu0 0
  %442 = vmatpush1.bf16.msra.mxu0 0
  %443 = vmatprep.subr.bf16.mxu0 0
  %444 = vmatpush1.bf16.msra.mxu0 0
  %445 = vmatprep.subr.bf16.mxu0 0
  %446 = vmatpush1.bf16.msra.mxu0 %v292
  %447 = vmatprep.subr.bf16.mxu0 0
  %448 = vmatpush1.bf16.msra.mxu0 %v291
  %449 = vmatprep.subr.bf16.mxu0 0
  %450 = vmatpush2.bf16.msra.mxu0 0
  %451 = vmatprep.subr.bf16.mxu0 0
  %452 = vmatpush2.bf16.msra.mxu0 0
  %453 = vmatprep.subr.bf16.mxu0 0
  %454 = vmatpush2.bf16.msra.mxu0 0
  %455 = vmatprep.subr.bf16.mxu0 0
  %456 = vmatpush2.bf16.msra.mxu0 0
  %457 = vmatprep.subr.bf16.mxu0 0
  %458 = vmatpush2.bf16.msra.mxu0 0
  %459 = vmatprep.subr.bf16.mxu0 0
  %460 = vmatpush2.bf16.msra.mxu0 0
  %461 = vmatprep.subr.bf16.mxu0 0
  %462 = vmatpush2.bf16.msra.mxu0 0
  %463 = vmatprep.subr.bf16.mxu0 0
  %464 = vmatpush2.bf16.msra.mxu0 0
  %465 = vmatprep.mubr.bf16.mxu0 0
  %466 = vmatmul.mubr.bf16.gmra.mxu0 %v313
  %v467 = vpop.f32.mrf.mxu0
  %v468 = vadd.f32 %v371, %v467
  %v469 = vpop.f32.mrf.mxu0
  %v470 = vpop.f32.mrf.mxu0
  %v471 = vadd.f32 %v374, %v470
  %v472 = vpop.f32.mrf.mxu0
  %473 = vmatprep.mubr.bf16.mxu0 0
  %474 = vmatmul.mubr.bf16.gmra.mxu0 %v316
  %v475 = vpop.f32.mrf.mxu0
  %v476 = vadd.f32 %v379, %v475
  %v477 = vpop.f32.mrf.mxu0
  %v478 = vpop.f32.mrf.mxu0
  %v479 = vadd.f32 %v382, %v478
  %v480 = vpop.f32.mrf.mxu0
  %481 = vmatprep.mubr.bf16.mxu0 0
  %482 = vmatmul.mubr.bf16.gmra.mxu0 %v319
  %v483 = vpop.f32.mrf.mxu0
  %v484 = vadd.f32 %v387, %v483
  %v485 = vpop.f32.mrf.mxu0
  %v486 = vpop.f32.mrf.mxu0
  %v487 = vadd.f32 %v390, %v486
  %v488 = vpop.f32.mrf.mxu0
  %489 = vmatprep.mubr.bf16.mxu0 0
  %490 = vmatmul.mubr.bf16.gmra.mxu0 %v322
  %v491 = vpop.f32.mrf.mxu0
  %v492 = vadd.f32 %v395, %v491
  %v493 = vpop.f32.mrf.mxu0
  %v494 = vpop.f32.mrf.mxu0
  %v495 = vadd.f32 %v398, %v494
  %v496 = vpop.f32.mrf.mxu0
  %497 = vmatprep.mubr.bf16.mxu0 0
  %498 = vmatmul.mubr.bf16.gmra.mxu0 %v325
  %v499 = vpop.f32.mrf.mxu0
  %v500 = vadd.f32 %v403, %v499
  %v501 = vpop.f32.mrf.mxu0
  %v502 = vpop.f32.mrf.mxu0
  %v503 = vadd.f32 %v406, %v502
  %v504 = vpop.f32.mrf.mxu0
  %505 = vmatprep.mubr.bf16.mxu0 0
  %506 = vmatmul.mubr.bf16.gmra.mxu0 %v328
  %v507 = vpop.f32.mrf.mxu0
  %v508 = vadd.f32 %v411, %v507
  %v509 = vpop.f32.mrf.mxu0
  %v510 = vpop.f32.mrf.mxu0
  %v511 = vadd.f32 %v414, %v510
  %v512 = vpop.f32.mrf.mxu0
  %513 = vmatprep.mubr.bf16.mxu0 0
  %514 = vmatmul.mubr.bf16.gmra.mxu0 %v331
  %v515 = vpop.f32.mrf.mxu0
  %v516 = vadd.f32 %v419, %v515
  %v517 = vpop.f32.mrf.mxu0
  %v518 = vpop.f32.mrf.mxu0
  %v519 = vadd.f32 %v422, %v518
  %v520 = vpop.f32.mrf.mxu0
  %521 = vmatprep.mubr.bf16.mxu0 0
  %522 = vmatmul.mubr.bf16.gmra.mxu0 %v334
  %v523 = vpop.f32.mrf.mxu0
  %v524 = vadd.f32 %v427, %v523
  %v525 = vpop.f32.mrf.mxu0
  %v526 = vpop.f32.mrf.mxu0
  %v527 = vadd.f32 %v430, %v526
  %v528 = vpop.f32.mrf.mxu0
  %529 = vdwg.mxu0
  %v530 = vmax.f32 %v468, %v484
  %v531 = vmax.f32 %v471, %v487
  %v532 = vmax.f32 %v476, %v492
  %v533 = vmax.f32 %v479, %v495
  %v534 = vmax.f32 %v500, %v516
  %v535 = vmax.f32 %v503, %v519
  %v536 = vmax.f32 %v508, %v524
  %v537 = vmax.f32 %v511, %v527
  %v538 = vmax.f32 %v530, %v534
  %v539 = vmax.f32 %v531, %v535
  %v540 = vmax.f32 %v532, %v536
  %v541 = vmax.f32 %v533, %v537
  %v542 = vld [vmem:[%s2] sm:$0x1]
  %v544 = vlaneseq
  %v545 = vshrl.u32 %v544, 7
  %v546 = vsub.s32 0, %v545
  %v547 = vrot.slane %v542, %v546
  %v549 = vadd.f32 %v538, %v547
  %v550 = vadd.f32 %v539, %v547
  %v551 = vadd.f32 %v540, %v547
  %v552 = vadd.f32 %v541, %v547
  %v553 = vmax.f32 %v549, 0.0
  %v554 = vmax.f32 %v550, 0.0
  %v555 = vmax.f32 %v551, 0.0
  %v556 = vmax.f32 %v552, 0.0
  %v557 = vpack.c.bf16 %v554, %v553
  %v558 = vpack.c.bf16 %v556, %v555
  %v561 = vunpack.c.l.b16 %v557
  %v562 = vunpack.c.h.b16 %v557
  %v563 = vunpack.c.l.b16 %v558
  %v564 = vunpack.c.h.b16 %v558
  %v565 = vpack.c.b16 %v561, %v561
  %v566 = vpack.c.b16 %v562, %v562
  %v567 = vpack.c.b16 %v563, %v563
  %v568 = vpack.c.b16 %v564, %v564
  %vm573 = vcmask 519168
  %574 = vst.msk [vmem:[%s3] sm:$0xf] %vm573, %v565
  %575 = vst.msk [vmem:[%s3 + $0x4] sm:$0xf] %vm573, %v566
  %576 = vst.msk [vmem:[%s3 + $0x8] sm:$0xf] %vm573, %v567
  %577 = vst.msk [vmem:[%s3 + $0xc] sm:$0xf] %vm573, %v568
  // Predicated region
  $region14: #{encoder_forward.5} parent=0 // pred_check
    _
  $region15: #{encoder_forward.5} parent=0 // pred_check_branch
    %579 = sbr.rel (0) target = $region17
  $region16: #{encoder_forward.5} parent=0 // pred_region
    _
  $region17: #{encoder_forward.5} parent=0 // pred_fallthru
    _
  // Predicated region
  $region18: #{encoder_forward.5} parent=0 // pred_check
    _
  $region19: #{encoder_forward.5} parent=0 // pred_check_branch
    %581 = sbr.rel (0) target = $region21
  $region20: #{encoder_forward.5} parent=0 // pred_region
    _
  $region21: #{encoder_forward.5} parent=0 // pred_fallthru
    _

// kernel: encoder_forward.6
$region0: #{encoder_forward.6}
  #allocation0 [shape = 'u32[]', space=smem, size = 0x4, offset = 0x4, fixed_abs, tag = 'smem constant byte address 0x4 - core index']
  #allocation1 [shape = 'u32[144,128]{1,0:T(1,128)}', space=vmem, size = 0x12000, scoped, tag = 'internal scratch']
  %s0 = inlined_call_operand.vmem [shape: bf16[4,8,576], index: 0, kind: input, shape index: {}]
  %s1 = inlined_call_operand.vmem [shape: bf16[576,128], index: 1, kind: input, shape index: {}]
  %s2 = inlined_call_operand.vmem [shape: f32[1,128], index: 2, kind: input, shape index: {}]
  %s3 = inlined_call_operand.vmem [shape: bf16[8,128], index: 3, kind: output, shape index: {}]
  %s4 = sld [smem:[#allocation0]]
  $region22: #{encoder_forward.6} parent=0
    _
  %s6 = ssub.s32 1, %s4
  %s7 = scalar_select 0, %s6, %s4
  // Predicated region
  $region2: #{encoder_forward.6} parent=0 // pred_check
    _
  $region3: #{encoder_forward.6} parent=0 // pred_check_branch
    %9 = sbr.rel (0) target = $region5
  $region4: #{encoder_forward.6} parent=0 // pred_region
    _
  $region5: #{encoder_forward.6} parent=0 // pred_fallthru
    _
  // Predicated region
  $region6: #{encoder_forward.6} parent=0 // pred_check
    _
  $region7: #{encoder_forward.6} parent=0 // pred_check_branch
    %11 = sbr.rel (0) target = $region9
  $region8: #{encoder_forward.6} parent=0 // pred_region
    _
  $region9: #{encoder_forward.6} parent=0 // pred_fallthru
    _
  // Predicated region
  $region10: #{encoder_forward.6} parent=0 // pred_check
    _
  $region11: #{encoder_forward.6} parent=0 // pred_check_branch
    %13 = sbr.rel (0) target = $region13
  $region12: #{encoder_forward.6} parent=0 // pred_region
    _
  $region13: #{encoder_forward.6} parent=0 // pred_fallthru
    _
  %v15 = vld [vmem:[%s1] sm:$0xf]
  %v16 = vld [vmem:[%s1 + $0x4] sm:$0xf]
  %v17 = vld [vmem:[%s1 + $0x8] sm:$0xf]
  %v18 = vld [vmem:[%s1 + $0xc] sm:$0xf]
  %v19 = vld [vmem:[%s1 + $0x10] sm:$0xf]
  %v20 = vld [vmem:[%s1 + $0x14] sm:$0xf]
  %v21 = vld [vmem:[%s1 + $0x18] sm:$0xf]
  %v22 = vld [vmem:[%s1 + $0x1c] sm:$0xf]
  %v23 = vld [vmem:[%s1 + $0x20] sm:$0xf]
  %v24 = vld [vmem:[%s1 + $0x24] sm:$0xf]
  %v25 = vld [vmem:[%s1 + $0x28] sm:$0xf]
  %v26 = vld [vmem:[%s1 + $0x2c] sm:$0xf]
  %v27 = vld [vmem:[%s1 + $0x30] sm:$0xf]
  %v28 = vld [vmem:[%s1 + $0x34] sm:$0xf]
  %v29 = vld [vmem:[%s1 + $0x38] sm:$0xf]
  %v30 = vld [vmem:[%s1 + $0x3c] sm:$0xf]
  %v31 = vld [vmem:[%s1 + $0x40] sm:$0xf]
  %v32 = vld [vmem:[%s1 + $0x44] sm:$0xf]
  %v33 = vld [vmem:[%s1 + $0x48] sm:$0xf]
  %v34 = vld [vmem:[%s1 + $0x4c] sm:$0xf]
  %v35 = vld [vmem:[%s1 + $0x50] sm:$0xf]
  %v36 = vld [vmem:[%s1 + $0x54] sm:$0xf]
  %v37 = vld [vmem:[%s1 + $0x58] sm:$0xf]
  %v38 = vld [vmem:[%s1 + $0x5c] sm:$0xf]
  %v39 = vld [vmem:[%s1 + $0x60] sm:$0xf]
  %v40 = vld [vmem:[%s1 + $0x64] sm:$0xf]
  %v41 = vld [vmem:[%s1 + $0x68] sm:$0xf]
  %v42 = vld [vmem:[%s1 + $0x6c] sm:$0xf]
  %v43 = vld [vmem:[%s1 + $0x70] sm:$0xf]
  %v44 = vld [vmem:[%s1 + $0x74] sm:$0xf]
  %v45 = vld [vmem:[%s1 + $0x78] sm:$0xf]
  %v46 = vld [vmem:[%s1 + $0x7c] sm:$0xf]
  %v47 = vld [vmem:[%s1 + $0x80] sm:$0xf]
  %v48 = vld [vmem:[%s1 + $0x84] sm:$0xf]
  %v49 = vld [vmem:[%s1 + $0x88] sm:$0xf]
  %v50 = vld [vmem:[%s1 + $0x8c] sm:$0xf]
  %v51 = vld [vmem:[%s1 + $0x90] sm:$0xf]
  %v52 = vld [vmem:[%s1 + $0x94] sm:$0xf]
  %v53 = vld [vmem:[%s1 + $0x98] sm:$0xf]
  %v54 = vld [vmem:[%s1 + $0x9c] sm:$0xf]
  %v55 = vld [vmem:[%s1 + $0xa0] sm:$0xf]
  %v56 = vld [vmem:[%s1 + $0xa4] sm:$0xf]
  %v57 = vld [vmem:[%s1 + $0xa8] sm:$0xf]
  %v58 = vld [vmem:[%s1 + $0xac] sm:$0xf]
  %v59 = vld [vmem:[%s1 + $0xb0] sm:$0xf]
  %v60 = vld [vmem:[%s1 + $0xb4] sm:$0xf]
  %v61 = vld [vmem:[%s1 + $0xb8] sm:$0xf]
  %v62 = vld [vmem:[%s1 + $0xbc] sm:$0xf]
  %v63 = vld [vmem:[%s1 + $0xc0] sm:$0xf]
  %v64 = vld [vmem:[%s1 + $0xc4] sm:$0xf]
  %v65 = vld [vmem:[%s1 + $0xc8] sm:$0xf]
  %v66 = vld [vmem:[%s1 + $0xcc] sm:$0xf]
  %v67 = vld [vmem:[%s1 + $0xd0] sm:$0xf]
  %v68 = vld [vmem:[%s1 + $0xd4] sm:$0xf]
  %v69 = vld [vmem:[%s1 + $0xd8] sm:$0xf]
  %v70 = vld [vmem:[%s1 + $0xdc] sm:$0xf]
  %v71 = vld [vmem:[%s1 + $0xe0] sm:$0xf]
  %v72 = vld [vmem:[%s1 + $0xe4] sm:$0xf]
  %v73 = vld [vmem:[%s1 + $0xe8] sm:$0xf]
  %v74 = vld [vmem:[%s1 + $0xec] sm:$0xf]
  %v75 = vld [vmem:[%s1 + $0xf0] sm:$0xf]
  %v76 = vld [vmem:[%s1 + $0xf4] sm:$0xf]
  %v77 = vld [vmem:[%s1 + $0xf8] sm:$0xf]
  %v78 = vld [vmem:[%s1 + $0xfc] sm:$0xf]
  %v79 = vld [vmem:[%s1 + $0x100] sm:$0xf]
  %v80 = vld [vmem:[%s1 + $0x104] sm:$0xf]
  %v81 = vld [vmem:[%s1 + $0x108] sm:$0xf]
  %v82 = vld [vmem:[%s1 + $0x10c] sm:$0xf]
  %v83 = vld [vmem:[%s1 + $0x110] sm:$0xf]
  %v84 = vld [vmem:[%s1 + $0x114] sm:$0xf]
  %v85 = vld [vmem:[%s1 + $0x118] sm:$0xf]
  %v86 = vld [vmem:[%s1 + $0x11c] sm:$0xf]
  %v87 = vld [vmem:[%s0] sm:$0xff]
  %v88 = vld [vmem:[%s0 + $0x8] sm:$0xff]
  %v89 = vld [vmem:[%s0 + $0x10] sm:$0xf]
  %v90 = vld [vmem:[%s0 + $0x14] sm:$0xff]
  %v91 = vld [vmem:[%s0 + $0x1c] sm:$0xff]
  %v92 = vld [vmem:[%s0 + $0x24] sm:$0xf]
  %v93 = vld [vmem:[%s0 + $0x28] sm:$0xff]
  %v94 = vld [vmem:[%s0 + $0x30] sm:$0xff]
  %v95 = vld [vmem:[%s0 + $0x38] sm:$0xf]
  %v96 = vld [vmem:[%s0 + $0x3c] sm:$0xff]
  %v97 = vld [vmem:[%s0 + $0x44] sm:$0xff]
  %v98 = vld [vmem:[%s0 + $0x4c] sm:$0xf]
  %v111 = vunpack.c.l.b16 %v87
  %v112 = vunpack.c.h.b16 %v87
  %v113 = vunpack.c.l.b16 %v88
  %v114 = vunpack.c.h.b16 %v88
  %v115 = vunpack.c.l.b16 %v89
  %v116 = vunpack.c.l.b16 %v90
  %v117 = vunpack.c.h.b16 %v90
  %v118 = vunpack.c.l.b16 %v91
  %v119 = vunpack.c.h.b16 %v91
  %v120 = vunpack.c.l.b16 %v92
  %v121 = vunpack.c.l.b16 %v93
  %v122 = vunpack.c.h.b16 %v93
  %v123 = vunpack.c.l.b16 %v94
  %v124 = vunpack.c.h.b16 %v94
  %v125 = vunpack.c.l.b16 %v95
  %v126 = vunpack.c.l.b16 %v96
  %v127 = vunpack.c.h.b16 %v96
  %v128 = vunpack.c.l.b16 %v97
  %v129 = vunpack.c.h.b16 %v97
  %v130 = vunpack.c.l.b16 %v98
  %v131 = vpack.c.b16 %v116, %v111
  %v132 = vpack.c.b16 %v117, %v112
  %v133 = vpack.c.b16 %v118, %v113
  %v134 = vpack.c.b16 %v119, %v114
  %v135 = vpack.c.b16 %v120, %v115
  %v136 = vpack.c.b16 %v126, %v121
  %v137 = vpack.c.b16 %v127, %v122
  %v138 = vpack.c.b16 %v128, %v123
  %v139 = vpack.c.b16 %v129, %v124
  %v140 = vpack.c.b16 %v130, %v125
  %v221 = vunpack.c.l.b16 %v15
  %v222 = vunpack.c.l.b16 %v16
  %v223 = vunpack.c.l.b16 %v17
  %v224 = vunpack.c.l.b16 %v18
  %v225 = vunpack.c.l.b16 %v19
  %v226 = vunpack.c.l.b16 %v20
  %v227 = vunpack.c.l.b16 %v21
  %v228 = vunpack.c.l.b16 %v22
  %v229 = vunpack.c.l.b16 %v23
  %v230 = vunpack.c.l.b16 %v24
  %v231 = vunpack.c.l.b16 %v25
  %v232 = vunpack.c.l.b16 %v26
  %v233 = vunpack.c.l.b16 %v27
  %v234 = vunpack.c.l.b16 %v28
  %v235 = vunpack.c.l.b16 %v29
  %v236 = vunpack.c.l.b16 %v30
  %v237 = vunpack.c.l.b16 %v31
  %v238 = vunpack.c.l.b16 %v32
  %v239 = vunpack.c.l.b16 %v33
  %v240 = vunpack.c.l.b16 %v34
  %v241 = vunpack.c.l.b16 %v35
  %v242 = vunpack.c.l.b16 %v36
  %v243 = vunpack.c.l.b16 %v37
  %v244 = vunpack.c.l.b16 %v38
  %v245 = vunpack.c.l.b16 %v39
  %v246 = vunpack.c.l.b16 %v40
  %v247 = vunpack.c.l.b16 %v41
  %v248 = vunpack.c.l.b16 %v42
  %v249 = vunpack.c.l.b16 %v43
  %v250 = vunpack.c.l.b16 %v44
  %v251 = vunpack.c.l.b16 %v45
  %v252 = vunpack.c.l.b16 %v46
  %v253 = vunpack.c.l.b16 %v47
  %v254 = vunpack.c.l.b16 %v48
  %v255 = vunpack.c.l.b16 %v49
  %v256 = vunpack.c.l.b16 %v50
  %v257 = vunpack.c.l.b16 %v51
  %v258 = vunpack.c.l.b16 %v52
  %v259 = vunpack.c.l.b16 %v53
  %v260 = vunpack.c.l.b16 %v54
  %v261 = vunpack.c.l.b16 %v55
  %v262 = vunpack.c.l.b16 %v56
  %v263 = vunpack.c.l.b16 %v57
  %v264 = vunpack.c.l.b16 %v58
  %v265 = vunpack.c.l.b16 %v59
  %v266 = vunpack.c.l.b16 %v60
  %v267 = vunpack.c.l.b16 %v61
  %v268 = vunpack.c.l.b16 %v62
  %v269 = vunpack.c.l.b16 %v63
  %v270 = vunpack.c.l.b16 %v64
  %v271 = vunpack.c.l.b16 %v65
  %v272 = vunpack.c.l.b16 %v66
  %v273 = vunpack.c.l.b16 %v67
  %v274 = vunpack.c.l.b16 %v68
  %v275 = vunpack.c.l.b16 %v69
  %v276 = vunpack.c.l.b16 %v70
  %v277 = vunpack.c.l.b16 %v71
  %v278 = vunpack.c.l.b16 %v72
  %v279 = vunpack.c.l.b16 %v73
  %v280 = vunpack.c.l.b16 %v74
  %v281 = vunpack.c.l.b16 %v75
  %v282 = vunpack.c.l.b16 %v76
  %v283 = vunpack.c.l.b16 %v77
  %v284 = vunpack.c.l.b16 %v78
  %v285 = vunpack.c.l.b16 %v79
  %v286 = vunpack.c.l.b16 %v80
  %v287 = vunpack.c.l.b16 %v81
  %v288 = vunpack.c.l.b16 %v82
  %v289 = vunpack.c.l.b16 %v83
  %v290 = vunpack.c.l.b16 %v84
  %v291 = vunpack.c.l.b16 %v85
  %v292 = vunpack.c.l.b16 %v86
  %v293 = vpack.c.b16 %v222, %v221
  %v294 = vpack.c.b16 %v224, %v223
  %v295 = vpack.c.b16 %v226, %v225
  %v296 = vpack.c.b16 %v228, %v227
  %v297 = vpack.c.b16 %v230, %v229
  %v298 = vpack.c.b16 %v232, %v231
  %v299 = vpack.c.b16 %v234, %v233
  %v300 = vpack.c.b16 %v236, %v235
  %v301 = vpack.c.b16 %v238, %v237
  %v302 = vpack.c.b16 %v240, %v239
  %v303 = vpack.c.b16 %v242, %v241
  %v304 = vpack.c.b16 %v244, %v243
  %v305 = vpack.c.b16 %v246, %v245
  %v306 = vpack.c.b16 %v248, %v247
  %v307 = vpack.c.b16 %v250, %v249
  %v308 = vpack.c.b16 %v252, %v251
  %v309 = vpack.c.b16 %v254, %v253
  %v310 = vpack.c.b16 %v256, %v255
  %v311 = vpack.c.b16 %v258, %v257
  %v312 = vpack.c.b16 %v260, %v259
  %v313 = vpack.c.b16 %v262, %v261
  %v314 = vpack.c.b16 %v264, %v263
  %v315 = vpack.c.b16 %v266, %v265
  %v316 = vpack.c.b16 %v268, %v267
  %v317 = vpack.c.b16 %v270, %v269
  %v318 = vpack.c.b16 %v272, %v271
  %v319 = vpack.c.b16 %v274, %v273
  %v320 = vpack.c.b16 %v276, %v275
  %v321 = vpack.c.b16 %v278, %v277
  %v322 = vpack.c.b16 %v280, %v279
  %v323 = vpack.c.b16 %v282, %v281
  %v324 = vpack.c.b16 %v284, %v283
  %v325 = vpack.c.b16 %v286, %v285
  %v326 = vpack.c.b16 %v288, %v287
  %v327 = vpack.c.b16 %v290, %v289
  %v328 = vpack.c.b16 %v292, %v291
  %vm365 = vcmask 523264
  %v367 = vsel %vm365, %v135, 0
  %v370 = vsel %vm365, %v140, 0
  %372 = vmatprep.subr.bf16.mxu0 0
  %373 = vmatpush1.bf16.msra.mxu0 %v300
  %374 = vmatprep.subr.bf16.mxu0 0
  %375 = vmatpush1.bf16.msra.mxu0 %v299
  %376 = vmatprep.subr.bf16.mxu0 0
  %377 = vmatpush1.bf16.msra.mxu0 %v298
  %378 = vmatprep.subr.bf16.mxu0 0
  %379 = vmatpush1.bf16.msra.mxu0 %v297
  %380 = vmatprep.subr.bf16.mxu0 0
  %381 = vmatpush1.bf16.msra.mxu0 %v296
  %382 = vmatprep.subr.bf16.mxu0 0
  %383 = vmatpush1.bf16.msra.mxu0 %v295
  %384 = vmatprep.subr.bf16.mxu0 0
  %385 = vmatpush1.bf16.msra.mxu0 %v294
  %386 = vmatprep.subr.bf16.mxu0 0
  %387 = vmatpush1.bf16.msra.mxu0 %v293
  %388 = vmatprep.subr.bf16.mxu0 0
  %389 = vmatpush2.bf16.msra.mxu0 %v308
  %390 = vmatprep.subr.bf16.mxu0 0
  %391 = vmatpush2.bf16.msra.mxu0 %v307
  %392 = vmatprep.subr.bf16.mxu0 0
  %393 = vmatpush2.bf16.msra.mxu0 %v306
  %394 = vmatprep.subr.bf16.mxu0 0
  %395 = vmatpush2.bf16.msra.mxu0 %v305
  %396 = vmatprep.subr.bf16.mxu0 0
  %397 = vmatpush2.bf16.msra.mxu0 %v304
  %398 = vmatprep.subr.bf16.mxu0 0
  %399 = vmatpush2.bf16.msra.mxu0 %v303
  %400 = vmatprep.subr.bf16.mxu0 0
  %401 = vmatpush2.bf16.msra.mxu0 %v302
  %402 = vmatprep.subr.bf16.mxu0 0
  %403 = vmatpush2.bf16.msra.mxu0 %v301
  %404 = vmatprep.mubr.bf16.mxu0 %v132
  %405 = vmatmul.mubr.bf16.gmra.mxu0 %v131
  %v406 = vpop.f32.mrf.mxu0
  %v407 = vadd.f32 0.0, %v406
  %v408 = vpop.f32.mrf.mxu0
  %v409 = vpop.f32.mrf.mxu0
  %v410 = vadd.f32 0.0, %v409
  %v411 = vpop.f32.mrf.mxu0
  %412 = vmatprep.mubr.bf16.mxu0 %v137
  %413 = vmatmul.mubr.bf16.gmra.mxu0 %v136
  %v414 = vpop.f32.mrf.mxu0
  %v415 = vadd.f32 0.0, %v414
  %v416 = vpop.f32.mrf.mxu0
  %v417 = vpop.f32.mrf.mxu0
  %v418 = vadd.f32 0.0, %v417
  %v419 = vpop.f32.mrf.mxu0
  %420 = vdwg.mxu0
  %421 = vmatprep.subr.bf16.mxu0 0
  %422 = vmatpush1.bf16.msra.mxu0 %v316
  %423 = vmatprep.subr.bf16.mxu0 0
  %424 = vmatpush1.bf16.msra.mxu0 %v315
  %425 = vmatprep.subr.bf16.mxu0 0
  %426 = vmatpush1.bf16.msra.mxu0 %v314
  %427 = vmatprep.subr.bf16.mxu0 0
  %428 = vmatpush1.bf16.msra.mxu0 %v313
  %429 = vmatprep.subr.bf16.mxu0 0
  %430 = vmatpush1.bf16.msra.mxu0 %v312
  %431 = vmatprep.subr.bf16.mxu0 0
  %432 = vmatpush1.bf16.msra.mxu0 %v311
  %433 = vmatprep.subr.bf16.mxu0 0
  %434 = vmatpush1.bf16.msra.mxu0 %v310
  %435 = vmatprep.subr.bf16.mxu0 0
  %436 = vmatpush1.bf16.msra.mxu0 %v309
  %437 = vmatprep.subr.bf16.mxu0 0
  %438 = vmatpush2.bf16.msra.mxu0 %v324
  %439 = vmatprep.subr.bf16.mxu0 0
  %440 = vmatpush2.bf16.msra.mxu0 %v323
  %441 = vmatprep.subr.bf16.mxu0 0
  %442 = vmatpush2.bf16.msra.mxu0 %v322
  %443 = vmatprep.subr.bf16.mxu0 0
  %444 = vmatpush2.bf16.msra.mxu0 %v321
  %445 = vmatprep.subr.bf16.mxu0 0
  %446 = vmatpush2.bf16.msra.mxu0 %v320
  %447 = vmatprep.subr.bf16.mxu0 0
  %448 = vmatpush2.bf16.msra.mxu0 %v319
  %449 = vmatprep.subr.bf16.mxu0 0
  %450 = vmatpush2.bf16.msra.mxu0 %v318
  %451 = vmatprep.subr.bf16.mxu0 0
  %452 = vmatpush2.bf16.msra.mxu0 %v317
  %453 = vmatprep.mubr.bf16.mxu0 %v134
  %454 = vmatmul.mubr.bf16.gmra.mxu0 %v133
  %v455 = vpop.f32.mrf.mxu0
  %v456 = vadd.f32 %v407, %v455
  %v457 = vpop.f32.mrf.mxu0
  %v458 = vpop.f32.mrf.mxu0
  %v459 = vadd.f32 %v410, %v458
  %v460 = vpop.f32.mrf.mxu0
  %461 = vmatprep.mubr.bf16.mxu0 %v139
  %462 = vmatmul.mubr.bf16.gmra.mxu0 %v138
  %v463 = vpop.f32.mrf.mxu0
  %v464 = vadd.f32 %v415, %v463
  %v465 = vpop.f32.mrf.mxu0
  %v466 = vpop.f32.mrf.mxu0
  %v467 = vadd.f32 %v418, %v466
  %v468 = vpop.f32.mrf.mxu0
  %469 = vdwg.mxu0
  %470 = vmatprep.subr.bf16.mxu0 0
  %471 = vmatpush1.bf16.msra.mxu0 0
  %472 = vmatprep.subr.bf16.mxu0 0
  %473 = vmatpush1.bf16.msra.mxu0 0
  %474 = vmatprep.subr.bf16.mxu0 0
  %475 = vmatpush1.bf16.msra.mxu0 0
  %476 = vmatprep.subr.bf16.mxu0 0
  %477 = vmatpush1.bf16.msra.mxu0 0
  %478 = vmatprep.subr.bf16.mxu0 0
  %479 = vmatpush1.bf16.msra.mxu0 %v328
  %480 = vmatprep.subr.bf16.mxu0 0
  %481 = vmatpush1.bf16.msra.mxu0 %v327
  %482 = vmatprep.subr.bf16.mxu0 0
  %483 = vmatpush1.bf16.msra.mxu0 %v326
  %484 = vmatprep.subr.bf16.mxu0 0
  %485 = vmatpush1.bf16.msra.mxu0 %v325
  %486 = vmatprep.subr.bf16.mxu0 0
  %487 = vmatpush2.bf16.msra.mxu0 0
  %488 = vmatprep.subr.bf16.mxu0 0
  %489 = vmatpush2.bf16.msra.mxu0 0
  %490 = vmatprep.subr.bf16.mxu0 0
  %491 = vmatpush2.bf16.msra.mxu0 0
  %492 = vmatprep.subr.bf16.mxu0 0
  %493 = vmatpush2.bf16.msra.mxu0 0
  %494 = vmatprep.subr.bf16.mxu0 0
  %495 = vmatpush2.bf16.msra.mxu0 0
  %496 = vmatprep.subr.bf16.mxu0 0
  %497 = vmatpush2.bf16.msra.mxu0 0
  %498 = vmatprep.subr.bf16.mxu0 0
  %499 = vmatpush2.bf16.msra.mxu0 0
  %500 = vmatprep.subr.bf16.mxu0 0
  %501 = vmatpush2.bf16.msra.mxu0 0
  %502 = vmatprep.mubr.bf16.mxu0 0
  %503 = vmatmul.mubr.bf16.gmra.mxu0 %v367
  %v504 = vpop.f32.mrf.mxu0
  %v505 = vadd.f32 %v456, %v504
  %v506 = vpop.f32.mrf.mxu0
  %v507 = vpop.f32.mrf.mxu0
  %v508 = vadd.f32 %v459, %v507
  %v509 = vpop.f32.mrf.mxu0
  %510 = vmatprep.mubr.bf16.mxu0 0
  %511 = vmatmul.mubr.bf16.gmra.mxu0 %v370
  %v512 = vpop.f32.mrf.mxu0
  %v513 = vadd.f32 %v464, %v512
  %v514 = vpop.f32.mrf.mxu0
  %v515 = vpop.f32.mrf.mxu0
  %v516 = vadd.f32 %v467, %v515
  %v517 = vpop.f32.mrf.mxu0
  %518 = vdwg.mxu0
  %v519 = vmax.f32 %v505, %v508
  %v520 = vmax.f32 %v513, %v516
  %v521 = vmax.f32 %v519, %v520
  %v522 = vld [vmem:[%s2] sm:$0x1]
  %v524 = vlaneseq
  %v525 = vshrl.u32 %v524, 7
  %v526 = vsub.s32 0, %v525
  %v527 = vrot.slane %v522, %v526
  %v529 = vadd.f32 %v521, %v527
  %v530 = vmax.f32 %v529, 0.0
  %v531 = vpack.c.bf16 %v530, %v530
  %532 = vst [vmem:[%s3] sm:$0xf] %v531
  // Predicated region
  $region14: #{encoder_forward.6} parent=0 // pred_check
    _
  $region15: #{encoder_forward.6} parent=0 // pred_check_branch
    %534 = sbr.rel (0) target = $region17
  $region16: #{encoder_forward.6} parent=0 // pred_region
    _
  $region17: #{encoder_forward.6} parent=0 // pred_fallthru
    _
  // Predicated region
  $region18: #{encoder_forward.6} parent=0 // pred_check
    _
  $region19: #{encoder_forward.6} parent=0 // pred_check_branch
    %536 = sbr.rel (0) target = $region21
  $region20: #{encoder_forward.6} parent=0 // pred_region
    _
  $region21: #{encoder_forward.6} parent=0 // pred_fallthru
    _

// kernel: encoder_forward.7
$region0: #{encoder_forward.7}
  #allocation0 [shape = 'u32[]', space=smem, size = 0x4, offset = 0x4, fixed_abs, tag = 'smem constant byte address 0x4 - core index']
  #allocation1 [shape = 'u32[144,128]{1,0:T(1,128)}', space=vmem, size = 0x12000, scoped, tag = 'internal scratch']
  #allocation2 [shape = 'f32[2,128]{1,0:T(2,128)}', space=vmem, size = 0x400, scoped, tag = 'scratch operand']
  %s0 = inlined_call_operand.vmem [shape: bf16[2,512], index: 0, kind: input, shape index: {}]
  %s1 = inlined_call_operand.vmem [shape: bf16[512,128], index: 1, kind: input, shape index: {}]
  %s2 = inlined_call_operand.vmem [shape: f32[1,128], index: 2, kind: input, shape index: {}]
  %s3 = inlined_call_operand.vmem [shape: f32[128,128], index: 3, kind: input, shape index: {}]
  %s4 = inlined_call_operand.vmem [shape: f32[1,128], index: 4, kind: input, shape index: {}]
  %s5 = inlined_call_operand.hbm [shape: f32[2,128], index: 5, kind: output, shape index: {}]
  %s6 = sld [smem:[#allocation0]]
  $region38: #{encoder_forward.7} parent=0
    _
  %s8 = ssub.s32 1, %s6
  %s9 = scalar_select 0, %s8, %s6
  $region1: #{encoder_forward.7} parent=0
    #allocation3 [shape = 'u8[1024]{0}', space=vmem, size = 0x400, scoped, tag = 'output window, operand 0, single buffered']
    #allocation4 [shape = 's32[1]{0}', space=sflag, size = 0x4, scoped, tag = 'scoped memory for encoder_forward.7']
    %10 = vsyncpa [#allocation4], 0
    // Predicated region
    $region2: #{encoder_forward.7} parent=1 // pred_check
      _
    $region3: #{encoder_forward.7} parent=1 // pred_check_branch
      %12 = sbr.rel (0) target = $region5
    $region4: #{encoder_forward.7} parent=1 // pred_region
      _
    $region5: #{encoder_forward.7} parent=1 // pred_fallthru
      _
    // Predicated region
    $region6: #{encoder_forward.7} parent=1 // pred_check
      _
    $region7: #{encoder_forward.7} parent=1 // pred_check_branch
      %14 = sbr.rel (0) target = $region9
    $region8: #{encoder_forward.7} parent=1 // pred_region
      _
    $region9: #{encoder_forward.7} parent=1 // pred_fallthru
      _
    // Predicated region
    $region10: #{encoder_forward.7} parent=1 // pred_check
      _
    $region11: #{encoder_forward.7} parent=1 // pred_check_branch
      %16 = sbr.rel (0) target = $region13
    $region12: #{encoder_forward.7} parent=1 // pred_region
      _
    $region13: #{encoder_forward.7} parent=1 // pred_fallthru
      _
    // Predicated region
    $region14: #{encoder_forward.7} parent=1 // pred_check
      _
    $region15: #{encoder_forward.7} parent=1 // pred_check_branch
      %18 = sbr.rel (0) target = $region17
    $region16: #{encoder_forward.7} parent=1 // pred_region
      _
    $region17: #{encoder_forward.7} parent=1 // pred_fallthru
      _
    // Predicated region
    $region18: #{encoder_forward.7} parent=1 // pred_check
      _
    $region19: #{encoder_forward.7} parent=1 // pred_check_branch
      %20 = sbr.rel (0) target = $region21
    $region20: #{encoder_forward.7} parent=1 // pred_region
      _
    $region21: #{encoder_forward.7} parent=1 // pred_fallthru
      _
    %p22 = scmp.eq.s32.totalorder 0, 0
    // Predicated region
    $region22: #{encoder_forward.7} parent=1 // pred_check
      %p23 = pneg %p22
    $region23: #{encoder_forward.7} parent=1 // pred_check_branch
      %25 = sbr.rel (%p23) target = $region25
    $region24: #{encoder_forward.7} parent=1 // pred_region
      %26 = vst [vmem:[#allocation2] sm:$0x3] 0.0
    $region25: #{encoder_forward.7} parent=1 // pred_fallthru
      _
    %v27 = vld [vmem:[#allocation2] sm:$0x3]
    %v28 = vld [vmem:[%s0] sm:$0xf]
    %v29 = vld [vmem:[%s1] sm:$0xf]
    %v30 = vld [vmem:[%s1 + $0x4] sm:$0xf]
    %v31 = vld [vmem:[%s1 + $0x8] sm:$0xf]
    %v32 = vld [vmem:[%s1 + $0xc] sm:$0xf]
    %v33 = vld [vmem:[%s1 + $0x10] sm:$0xf]
    %v34 = vld [vmem:[%s1 + $0x14] sm:$0xf]
    %v35 = vld [vmem:[%s1 + $0x18] sm:$0xf]
    %v36 = vld [vmem:[%s1 + $0x1c] sm:$0xf]
    %v37 = vld [vmem:[%s1 + $0x20] sm:$0xf]
    %v38 = vld [vmem:[%s1 + $0x24] sm:$0xf]
    %v39 = vld [vmem:[%s1 + $0x28] sm:$0xf]
    %v40 = vld [vmem:[%s1 + $0x2c] sm:$0xf]
    %v41 = vld [vmem:[%s1 + $0x30] sm:$0xf]
    %v42 = vld [vmem:[%s1 + $0x34] sm:$0xf]
    %v43 = vld [vmem:[%s1 + $0x38] sm:$0xf]
    %v44 = vld [vmem:[%s1 + $0x3c] sm:$0xf]
    %v45 = vld [vmem:[%s1 + $0x40] sm:$0xf]
    %v46 = vld [vmem:[%s1 + $0x44] sm:$0xf]
    %v47 = vld [vmem:[%s1 + $0x48] sm:$0xf]
    %v48 = vld [vmem:[%s1 + $0x4c] sm:$0xf]
    %v49 = vld [vmem:[%s1 + $0x50] sm:$0xf]
    %v50 = vld [vmem:[%s1 + $0x54] sm:$0xf]
    %v51 = vld [vmem:[%s1 + $0x58] sm:$0xf]
    %v52 = vld [vmem:[%s1 + $0x5c] sm:$0xf]
    %v53 = vld [vmem:[%s1 + $0x60] sm:$0xf]
    %v54 = vld [vmem:[%s1 + $0x64] sm:$0xf]
    %v55 = vld [vmem:[%s1 + $0x68] sm:$0xf]
    %v56 = vld [vmem:[%s1 + $0x6c] sm:$0xf]
    %v57 = vld [vmem:[%s1 + $0x70] sm:$0xf]
    %v58 = vld [vmem:[%s1 + $0x74] sm:$0xf]
    %v59 = vld [vmem:[%s1 + $0x78] sm:$0xf]
    %v60 = vld [vmem:[%s1 + $0x7c] sm:$0xf]
    %v61 = vld [vmem:[%s1 + $0x80] sm:$0xf]
    %v62 = vld [vmem:[%s1 + $0x84] sm:$0xf]
    %v63 = vld [vmem:[%s1 + $0x88] sm:$0xf]
    %v64 = vld [vmem:[%s1 + $0x8c] sm:$0xf]
    %v65 = vld [vmem:[%s1 + $0x90] sm:$0xf]
    %v66 = vld [vmem:[%s1 + $0x94] sm:$0xf]
    %v67 = vld [vmem:[%s1 + $0x98] sm:$0xf]
    %v68 = vld [vmem:[%s1 + $0x9c] sm:$0xf]
    %v69 = vld [vmem:[%s1 + $0xa0] sm:$0xf]
    %v70 = vld [vmem:[%s1 + $0xa4] sm:$0xf]
    %v71 = vld [vmem:[%s1 + $0xa8] sm:$0xf]
    %v72 = vld [vmem:[%s1 + $0xac] sm:$0xf]
    %v73 = vld [vmem:[%s1 + $0xb0] sm:$0xf]
    %v74 = vld [vmem:[%s1 + $0xb4] sm:$0xf]
    %v75 = vld [vmem:[%s1 + $0xb8] sm:$0xf]
    %v76 = vld [vmem:[%s1 + $0xbc] sm:$0xf]
    %v77 = vld [vmem:[%s1 + $0xc0] sm:$0xf]
    %v78 = vld [vmem:[%s1 + $0xc4] sm:$0xf]
    %v79 = vld [vmem:[%s1 + $0xc8] sm:$0xf]
    %v80 = vld [vmem:[%s1 + $0xcc] sm:$0xf]
    %v81 = vld [vmem:[%s1 + $0xd0] sm:$0xf]
    %v82 = vld [vmem:[%s1 + $0xd4] sm:$0xf]
    %v83 = vld [vmem:[%s1 + $0xd8] sm:$0xf]
    %v84 = vld [vmem:[%s1 + $0xdc] sm:$0xf]
    %v85 = vld [vmem:[%s1 + $0xe0] sm:$0xf]
    %v86 = vld [vmem:[%s1 + $0xe4] sm:$0xf]
    %v87 = vld [vmem:[%s1 + $0xe8] sm:$0xf]
    %v88 = vld [vmem:[%s1 + $0xec] sm:$0xf]
    %v89 = vld [vmem:[%s1 + $0xf0] sm:$0xf]
    %v90 = vld [vmem:[%s1 + $0xf4] sm:$0xf]
    %v91 = vld [vmem:[%s1 + $0xf8] sm:$0xf]
    %v92 = vld [vmem:[%s1 + $0xfc] sm:$0xf]
    %v95 = vunpack.c.l.s4 1966171168
    %v96 = vunpack.c.0.s8 %v95
    %v97 = vlaneseq
    %v98 = vshrl.u32 %v97, 7
    %v99 = vsub.s32 %v96, %v98
    %v100 = vrot.slane %v28, %v99
    %v101 = vcombine.high %v100, %v100
    %v103 = vunpack.c.l.s4 1966171168
    %v104 = vunpack.c.0.s8 %v103
    %v105 = vlaneseq
    %v106 = vshrl.u32 %v105, 7
    %v107 = vsub.s32 %v104, %v106
    %v108 = vrot.slane %v100, %v107
    %v110 = vunpack.c.l.s4 1966171168
    %v111 = vunpack.c.0.s8 %v110
    %v112 = vlaneseq
    %v113 = vshrl.u32 %v112, 7
    %v114 = vsub.s32 %v111, %v113
    %v115 = vrot.slane %v101, %v114
    %v116 = vcombine.high %v108, %v108
    %v117 = vcombine.high %v115, %v115
    %v186 = vunpack.c.l.b16 %v29
    %v187 = vunpack.c.l.b16 %v30
    %v188 = vunpack.c.l.b16 %v31
    %v189 = vunpack.c.l.b16 %v32
    %v190 = vunpack.c.l.b16 %v33
    %v191 = vunpack.c.l.b16 %v34
    %v192 = vunpack.c.l.b16 %v35
    %v193 = vunpack.c.l.b16 %v36
    %v194 = vunpack.c.l.b16 %v37
    %v195 = vunpack.c.l.b16 %v38
    %v196 = vunpack.c.l.b16 %v39
    %v197 = vunpack.c.l.b16 %v40
    %v198 = vunpack.c.l.b16 %v41
    %v199 = vunpack.c.l.b16 %v42
    %v200 = vunpack.c.l.b16 %v43
    %v201 = vunpack.c.l.b16 %v44
    %v202 = vunpack.c.l.b16 %v45
    %v203 = vunpack.c.l.b16 %v46
    %v204 = vunpack.c.l.b16 %v47
    %v205 = vunpack.c.l.b16 %v48
    %v206 = vunpack.c.l.b16 %v49
    %v207 = vunpack.c.l.b16 %v50
    %v208 = vunpack.c.l.b16 %v51
    %v209 = vunpack.c.l.b16 %v52
    %v210 = vunpack.c.l.b16 %v53
    %v211 = vunpack.c.l.b16 %v54
    %v212 = vunpack.c.l.b16 %v55
    %v213 = vunpack.c.l.b16 %v56
    %v214 = vunpack.c.l.b16 %v57
    %v215 = vunpack.c.l.b16 %v58
    %v216 = vunpack.c.l.b16 %v59
    %v217 = vunpack.c.l.b16 %v60
    %v218 = vunpack.c.l.b16 %v61
    %v219 = vunpack.c.l.b16 %v62
    %v220 = vunpack.c.l.b16 %v63
    %v221 = vunpack.c.l.b16 %v64
    %v222 = vunpack.c.l.b16 %v65
    %v223 = vunpack.c.l.b16 %v66
    %v224 = vunpack.c.l.b16 %v67
    %v225 = vunpack.c.l.b16 %v68
    %v226 = vunpack.c.l.b16 %v69
    %v227 = vunpack.c.l.b16 %v70
    %v228 = vunpack.c.l.b16 %v71
    %v229 = vunpack.c.l.b16 %v72
    %v230 = vunpack.c.l.b16 %v73
    %v231 = vunpack.c.l.b16 %v74
    %v232 = vunpack.c.l.b16 %v75
    %v233 = vunpack.c.l.b16 %v76
    %v234 = vunpack.c.l.b16 %v77
    %v235 = vunpack.c.l.b16 %v78
    %v236 = vunpack.c.l.b16 %v79
    %v237 = vunpack.c.l.b16 %v80
    %v238 = vunpack.c.l.b16 %v81
    %v239 = vunpack.c.l.b16 %v82
    %v240 = vunpack.c.l.b16 %v83
    %v241 = vunpack.c.l.b16 %v84
    %v242 = vunpack.c.l.b16 %v85
    %v243 = vunpack.c.l.b16 %v86
    %v244 = vunpack.c.l.b16 %v87
    %v245 = vunpack.c.l.b16 %v88
    %v246 = vunpack.c.l.b16 %v89
    %v247 = vunpack.c.l.b16 %v90
    %v248 = vunpack.c.l.b16 %v91
    %v249 = vunpack.c.l.b16 %v92
    %v250 = vpack.c.b16 %v187, %v186
    %v251 = vpack.c.b16 %v189, %v188
    %v252 = vpack.c.b16 %v191, %v190
    %v253 = vpack.c.b16 %v193, %v192
    %v254 = vpack.c.b16 %v195, %v194
    %v255 = vpack.c.b16 %v197, %v196
    %v256 = vpack.c.b16 %v199, %v198
    %v257 = vpack.c.b16 %v201, %v200
    %v258 = vpack.c.b16 %v203, %v202
    %v259 = vpack.c.b16 %v205, %v204
    %v260 = vpack.c.b16 %v207, %v206
    %v261 = vpack.c.b16 %v209, %v208
    %v262 = vpack.c.b16 %v211, %v210
    %v263 = vpack.c.b16 %v213, %v212
    %v264 = vpack.c.b16 %v215, %v214
    %v265 = vpack.c.b16 %v217, %v216
    %v266 = vpack.c.b16 %v219, %v218
    %v267 = vpack.c.b16 %v221, %v220
    %v268 = vpack.c.b16 %v223, %v222
    %v269 = vpack.c.b16 %v225, %v224
    %v270 = vpack.c.b16 %v227, %v226
    %v271 = vpack.c.b16 %v229, %v228
    %v272 = vpack.c.b16 %v231, %v230
    %v273 = vpack.c.b16 %v233, %v232
    %v274 = vpack.c.b16 %v235, %v234
    %v275 = vpack.c.b16 %v237, %v236
    %v276 = vpack.c.b16 %v239, %v238
    %v277 = vpack.c.b16 %v241, %v240
    %v278 = vpack.c.b16 %v243, %v242
    %v279 = vpack.c.b16 %v245, %v244
    %v280 = vpack.c.b16 %v247, %v246
    %v281 = vpack.c.b16 %v249, %v248
    %314 = vmatprep.subr.bf16.mxu0 0
    %315 = vmatpush1.bf16.msra.mxu0 %v257
    %316 = vmatprep.subr.bf16.mxu0 0
    %317 = vmatpush1.bf16.msra.mxu0 %v256
    %318 = vmatprep.subr.bf16.mxu0 0
    %319 = vmatpush1.bf16.msra.mxu0 %v255
    %320 = vmatprep.subr.bf16.mxu0 0
    %321 = vmatpush1.bf16.msra.mxu0 %v254
    %322 = vmatprep.subr.bf16.mxu0 0
    %323 = vmatpush1.bf16.msra.mxu0 %v253
    %324 = vmatprep.subr.bf16.mxu0 0
    %325 = vmatpush1.bf16.msra.mxu0 %v252
    %326 = vmatprep.subr.bf16.mxu0 0
    %327 = vmatpush1.bf16.msra.mxu0 %v251
    %328 = vmatprep.subr.bf16.mxu0 0
    %329 = vmatpush1.bf16.msra.mxu0 %v250
    %330 = vmatprep.subr.bf16.mxu0 0
    %331 = vmatpush2.bf16.msra.mxu0 %v265
    %332 = vmatprep.subr.bf16.mxu0 0
    %333 = vmatpush2.bf16.msra.mxu0 %v264
    %334 = vmatprep.subr.bf16.mxu0 0
    %335 = vmatpush2.bf16.msra.mxu0 %v263
    %336 = vmatprep.subr.bf16.mxu0 0
    %337 = vmatpush2.bf16.msra.mxu0 %v262
    %338 = vmatprep.subr.bf16.mxu0 0
    %339 = vmatpush2.bf16.msra.mxu0 %v261
    %340 = vmatprep.subr.bf16.mxu0 0
    %341 = vmatpush2.bf16.msra.mxu0 %v260
    %342 = vmatprep.subr.bf16.mxu0 0
    %343 = vmatpush2.bf16.msra.mxu0 %v259
    %344 = vmatprep.subr.bf16.mxu0 0
    %345 = vmatpush2.bf16.msra.mxu0 %v258
    %346 = vmatprep.mubr.bf16.mxu0 %v115
    %347 = vmatmul.mubr.bf16.gmra.mxu0 %v108
    %v348 = vpop.f32.mrf.mxu0
    %v349 = vadd.f32 0.0, %v348
    %v350 = vpop.f32.mrf.mxu0
    %v351 = vpop.f32.mrf.mxu0
    %v352 = vpop.f32.mrf.mxu0
    %353 = vdwg.mxu0
    %354 = vmatprep.subr.bf16.mxu0 0
    %355 = vmatpush1.bf16.msra.mxu0 %v273
    %356 = vmatprep.subr.bf16.mxu0 0
    %357 = vmatpush1.bf16.msra.mxu0 %v272
    %358 = vmatprep.subr.bf16.mxu0 0
    %359 = vmatpush1.bf16.msra.mxu0 %v271
    %360 = vmatprep.subr.bf16.mxu0 0
    %361 = vmatpush1.bf16.msra.mxu0 %v270
    %362 = vmatprep.subr.bf16.mxu0 0
    %363 = vmatpush1.bf16.msra.mxu0 %v269
    %364 = vmatprep.subr.bf16.mxu0 0
    %365 = vmatpush1.bf16.msra.mxu0 %v268
    %366 = vmatprep.subr.bf16.mxu0 0
    %367 = vmatpush1.bf16.msra.mxu0 %v267
    %368 = vmatprep.subr.bf16.mxu0 0
    %369 = vmatpush1.bf16.msra.mxu0 %v266
    %370 = vmatprep.subr.bf16.mxu0 0
    %371 = vmatpush2.bf16.msra.mxu0 %v281
    %372 = vmatprep.subr.bf16.mxu0 0
    %373 = vmatpush2.bf16.msra.mxu0 %v280
    %374 = vmatprep.subr.bf16.mxu0 0
    %375 = vmatpush2.bf16.msra.mxu0 %v279
    %376 = vmatprep.subr.bf16.mxu0 0
    %377 = vmatpush2.bf16.msra.mxu0 %v278
    %378 = vmatprep.subr.bf16.mxu0 0
    %379 = vmatpush2.bf16.msra.mxu0 %v277
    %380 = vmatprep.subr.bf16.mxu0 0
    %381 = vmatpush2.bf16.msra.mxu0 %v276
    %382 = vmatprep.subr.bf16.mxu0 0
    %383 = vmatpush2.bf16.msra.mxu0 %v275
    %384 = vmatprep.subr.bf16.mxu0 0
    %385 = vmatpush2.bf16.msra.mxu0 %v274
    %386 = vmatprep.mubr.bf16.mxu0 %v117
    %387 = vmatmul.mubr.bf16.gmra.mxu0 %v116
    %v388 = vpop.f32.mrf.mxu0
    %v389 = vadd.f32 %v349, %v388
    %v390 = vpop.f32.mrf.mxu0
    %v391 = vpop.f32.mrf.mxu0
    %v392 = vpop.f32.mrf.mxu0
    %393 = vdwg.mxu0
    %v394 = vadd.f32 %v27, %v389
    %395 = vst [vmem:[#allocation2] sm:$0x3] %v394
    // Predicated region
    $region26: #{encoder_forward.7} parent=1 // pred_check
      %p396 = pneg %p22
    $region27: #{encoder_forward.7} parent=1 // pred_check_branch
      %398 = sbr.rel (%p396) target = $region29
    $region28: #{encoder_forward.7} parent=1 // pred_region
      %v399 = vld [vmem:[#allocation2] sm:$0x3]
      %v400 = vld [vmem:[%s2] sm:$0x1]
      %v402 = vlaneseq
      %v403 = vshrl.u32 %v402, 7
      %v404 = vsub.s32 0, %v403
      %v405 = vrot.slane %v400, %v404
      %v407 = vadd.f32 %v399, %v405
      %v408 = vld [vmem:[%s3] sm:$0xff]
      %v409 = vld [vmem:[%s3 + $0x8] sm:$0xff]
      %v410 = vld [vmem:[%s3 + $0x10] sm:$0xff]
      %v411 = vld [vmem:[%s3 + $0x18] sm:$0xff]
      %v412 = vld [vmem:[%s3 + $0x20] sm:$0xff]
      %v413 = vld [vmem:[%s3 + $0x28] sm:$0xff]
      %v414 = vld [vmem:[%s3 + $0x30] sm:$0xff]
      %v415 = vld [vmem:[%s3 + $0x38] sm:$0xff]
      %v416 = vld [vmem:[%s3 + $0x40] sm:$0xff]
      %v417 = vld [vmem:[%s3 + $0x48] sm:$0xff]
      %v418 = vld [vmem:[%s3 + $0x50] sm:$0xff]
      %v419 = vld [vmem:[%s3 + $0x58] sm:$0xff]
      %v420 = vld [vmem:[%s3 + $0x60] sm:$0xff]
      %v421 = vld [vmem:[%s3 + $0x68] sm:$0xff]
      %v422 = vld [vmem:[%s3 + $0x70] sm:$0xff]
      %v423 = vld [vmem:[%s3 + $0x78] sm:$0xff]
      %v424 = vld [vmem:[%s4] sm:$0x1]
      %v426 = vlaneseq
      %v427 = vshrl.u32 %v426, 7
      %v428 = vsub.s32 0, %v427
      %v429 = vrot.slane %v424, %v428
      %431 = vmatprep.subr.mxu0 0.0
      %432 = vmatpush1.msra.mxu0 %v423
      %433 = vmatprep.subr.mxu0 0.0
      %434 = vmatpush1.msra.mxu0 %v422
      %435 = vmatprep.subr.mxu0 0.0
      %436 = vmatpush1.msra.mxu0 %v421
      %437 = vmatprep.subr.mxu0 0.0
      %438 = vmatpush1.msra.mxu0 %v420
      %439 = vmatprep.subr.mxu0 0.0
      %440 = vmatpush1.msra.mxu0 %v419
      %441 = vmatprep.subr.mxu0 0.0
      %442 = vmatpush1.msra.mxu0 %v418
      %443 = vmatprep.subr.mxu0 0.0
      %444 = vmatpush1.msra.mxu0 %v417
      %445 = vmatprep.subr.mxu0 0.0
      %446 = vmatpush1.msra.mxu0 %v416
      %447 = vmatprep.subr.mxu0 0.0
      %448 = vmatpush1.msra.mxu0 %v415
      %449 = vmatprep.subr.mxu0 0.0
      %450 = vmatpush1.msra.mxu0 %v414
      %451 = vmatprep.subr.mxu0 0.0
      %452 = vmatpush1.msra.mxu0 %v413
      %453 = vmatprep.subr.mxu0 0.0
      %454 = vmatpush1.msra.mxu0 %v412
      %455 = vmatprep.subr.mxu0 0.0
      %456 = vmatpush1.msra.mxu0 %v411
      %457 = vmatprep.subr.mxu0 0.0
      %458 = vmatpush1.msra.mxu0 %v410
      %459 = vmatprep.subr.mxu0 0.0
      %460 = vmatpush1.msra.mxu0 %v409
      %461 = vmatprep.subr.mxu0 0.0
      %462 = vmatpush1.msra.mxu0 %v408
      %463 = vmatprep.subr.mxu0 0.0
      %464 = vmatpush2.msra.mxu0 0.0
      %465 = vmatprep.subr.mxu0 0.0
      %466 = vmatpush2.msra.mxu0 0.0
      %467 = vmatprep.subr.mxu0 0.0
      %468 = vmatpush2.msra.mxu0 0.0
      %469 = vmatprep.subr.mxu0 0.0
      %470 = vmatpush2.msra.mxu0 0.0
      %471 = vmatprep.subr.mxu0 0.0
      %472 = vmatpush2.msra.mxu0 0.0
      %473 = vmatprep.subr.mxu0 0.0
      %474 = vmatpush2.msra.mxu0 0.0
      %475 = vmatprep.subr.mxu0 0.0
      %476 = vmatpush2.msra.mxu0 0.0
      %477 = vmatprep.subr.mxu0 0.0
      %478 = vmatpush2.msra.mxu0 0.0
      %479 = vmatprep.subr.mxu0 0.0
      %480 = vmatpush2.msra.mxu0 0.0
      %481 = vmatprep.subr.mxu0 0.0
      %482 = vmatpush2.msra.mxu0 0.0
      %483 = vmatprep.subr.mxu0 0.0
      %484 = vmatpush2.msra.mxu0 0.0
      %485 = vmatprep.subr.mxu0 0.0
      %486 = vmatpush2.msra.mxu0 0.0
      %487 = vmatprep.subr.mxu0 0.0
      %488 = vmatpush2.msra.mxu0 0.0
      %489 = vmatprep.subr.mxu0 0.0
      %490 = vmatpush2.msra.mxu0 0.0
      %491 = vmatprep.subr.mxu0 0.0
      %492 = vmatpush2.msra.mxu0 0.0
      %493 = vmatprep.subr.mxu0 0.0
      %494 = vmatpush2.msra.mxu0 0.0
      %495 = vmatprep.mubr.f32.mxu0 0.0
      %496 = vmatmul.mubr.f32.gmra.mxu0 %v407
      %v497 = vpop.f32.mrf.mxu0
      %v498 = vadd.f32 %v429, %v497
      %v499 = vpop.f32.mrf.mxu0
      %500 = vdwg.mxu0
      %501 = vst [vmem:[#allocation3] sm:$0x3] %v498
    $region29: #{encoder_forward.7} parent=1 // pred_fallthru
      _
    // Predicated region
    $region30: #{encoder_forward.7} parent=1 // pred_check
      _
    $region31: #{encoder_forward.7} parent=1 // pred_check_branch
      %503 = sbr.rel (0) target = $region33
    $region32: #{encoder_forward.7} parent=1 // pred_region
      %s505 = ssub.s32 32, 32
      %506 = vsyncadd [#allocation4], %s505
      %s508 = sshll.u32 [#allocation3], 4
      %s509 = int_to_ptr.vmem [resolvable:$true] %s508
      %511 = dma.vmem_to_hbm [thread:$0]  %s509, 32, %s5, [#allocation4]
    $region33: #{encoder_forward.7} parent=1 // pred_fallthru
      _
    // Predicated region
    $region34: #{encoder_forward.7} parent=1 // pred_check
      _
    $region35: #{encoder_forward.7} parent=1 // pred_check_branch
      %513 = sbr.rel (0) target = $region37
    $region36: #{encoder_forward.7} parent=1 // pred_region
      %514 = dma.done [#allocation4], 32
    $region37: #{encoder_forward.7} parent=1 // pred_fallthru
      _
    %515 = vsyncpa [#allocation4], 1

</llo_original>
